<compile_context>
chip_gen: v7x
topology: tpu7x:2x2x1
jax: 0.10.0
libtpu: 0.0.40
codegen_flags: <defaults>
</compile_context>

<pallas_src>
import functools

import numpy as np

import jax
import jax.numpy as jnp
from jax import lax
from jax.experimental import pallas as pl
from jax.experimental.pallas import tpu as pltpu


# ----------------------------------------------------------------------- weight packing
def _rpad16(r):
    return -(-r // 16) * 16


def _weight_layout(E, C, M, LH, K):
    """Static layout of the single packed weight slab (rows x width)."""
    width = max(E, M, C, LH, 8)
    blocks = {}
    off = 0
    for name, rows, cols in (("wl1", LH, E), ("wl2", LH, LH), ("wl3", 1, LH),
                             ("wmn", M, C), ("wme", M, E),
                             ("wih", 3 * C, M), ("whh", 3 * C, C), ("wro", K, C)):
        rp = _rpad16(rows)
        blocks[name] = (off, rows, cols, rp)
        off += rp
    bias_off = off
    bias_cols = {"bih": (0, 3 * C), "bhh": (1, 3 * C), "bm": (2, M),
                 "bl1": (3, LH), "bl2": (4, LH), "bl3": (5, 1), "bro": (6, K)}
    bias_rows = max(r for _, r in bias_cols.values())
    bias_rpad = _rpad16(bias_rows)
    assert width >= len(bias_cols)
    total = bias_off + bias_rpad
    return blocks, bias_off, bias_rpad, bias_cols, total, width


def pack_gpnn_weights(params, E, C, M, LH, K, dtype=jnp.bfloat16):
    """One-time (outside jit) packing of all GPNN weights/biases into one channel-first
    slab. Storage is bf16: default MXU precision truncates operands to bf16 anyway, so
    this is accuracy-neutral at the 5e-2 test tolerance while halving DMA bytes."""
    blocks, bias_off, _, bias_cols, total, width = _weight_layout(E, C, M, LH, K)
    p = {k: np.asarray(v, np.float32) for k, v in params.items()}
    mats = {
        "wl1": p["wl1"].T, "wl2": p["wl2"].T, "wl3": p["wl3"].T,
        "wmn": p["wmn"].T, "wme": p["wme"].T,
        "wih": np.concatenate([p["wir"].T, p["wiz"].T, p["win"].T], axis=0),
        "whh": np.concatenate([p["whr"].T, p["whz"].T, p["whn"].T], axis=0),
        "wro": p["wro"].T,
    }
    vecs = {
        "bih": np.concatenate([p["bir"].ravel(), p["biz"].ravel(), p["bin"].ravel()]),
        "bhh": np.concatenate([p["bhr"].ravel(), p["bhz"].ravel(), p["bhn"].ravel()]),
        "bm": p["bm"].ravel(), "bl1": p["bl1"].ravel(), "bl2": p["bl2"].ravel(),
        "bl3": p["bl3"].ravel(), "bro": p["bro"].ravel(),
    }
    slab = np.zeros((total, width), np.float32)
    for name, (off, rows, cols, _) in blocks.items():
        m = mats[name]
        assert m.shape == (rows, cols), (name, m.shape, rows, cols)
        slab[off:off + rows, :cols] = m
    for name, (col, rows) in bias_cols.items():
        v = vecs[name]
        assert v.shape == (rows,), (name, v.shape, rows)
        slab[bias_off:bias_off + rows, col] = v
    return jnp.asarray(slab, dtype)


# ----------------------------------------------------------------------------- kernel
def _build_gpnn_call(n_rounds, B, N, E, C, M, LH, K):
    """Fused whole-array (gridless) pallas_call for one GPNN forward pass."""
    f32 = jnp.float32
    NN, BN, BNN = N * N, B * N, B * N * N
    blocks, bias_off, bias_rpad, bias_cols, _, _ = _weight_layout(E, C, M, LH, K)

    def _idiv(x, d):
        if d == 1:
            return x
        if d & (d - 1) == 0:
            return x >> (int(d).bit_length() - 1)
        return x // d  # TODO(synk): non-power-of-two N/B falls back to vector integer div

    def _imod(x, d):
        if d == 1:
            return jnp.zeros_like(x)
        if d & (d - 1) == 0:
            return x & (d - 1)
        return x % d

    def kernel(human_ref, obj_ref, edge_ref, node_ref, w_ref, adj_ref, lab_ref):
        def mm(a, b):
            # default MXU precision (5e-2 test tolerance; multi-pass HIGHEST not needed)
            return jnp.dot(a, b, preferred_element_type=f32)

        def mm_nt(a, b):
            # A @ B.T (contract last dims) -- the MXU transposed-rhs form (q @ k.T pattern)
            return lax.dot_general(a, b, (((1,), (1,)), ((), ())),
                                   preferred_element_type=f32)

        def sigmoid(x):
            # single EUP push (tanh) instead of exp + reciprocal
            return 0.5 * (jnp.tanh(0.5 * x) + 1.0)

        def eye(n):
            return (lax.broadcasted_iota(jnp.int32, (n, n), 0) ==
                    lax.broadcasted_iota(jnp.int32, (n, n), 1)).astype(f32)

        def wload(name):
            off, rows, cols, rpad = blocks[name]
            return w_ref[off:off + rpad, :].astype(f32)[:rows, :cols]

        bias_blk = w_ref[bias_off:bias_off + bias_rpad, :].astype(f32)

        def bias(name):
            col, rows = bias_cols[name]
            return bias_blk[:rows, col:col + 1]

        # ---- static selection / permutation one-hots built on the VPU (no HBM traffic) ----
        pq_p = lax.broadcasted_iota(jnp.int32, (BNN, BNN), 0)
        pq_q = lax.broadcasted_iota(jnp.int32, (BNN, BNN), 1)
        swap_p = _idiv(pq_p, NN) * NN + _imod(pq_p, N) * N + _imod(_idiv(pq_p, N), N)
        perm = (pq_q == swap_p).astype(f32)                    # pair (b,i,j) -> pair (b,j,i)

        sp_p = lax.broadcasted_iota(jnp.int32, (BNN, BN), 0)
        sp_n = lax.broadcasted_iota(jnp.int32, (BNN, BN), 1)
        row_node = _idiv(sp_p, NN) * N + _imod(_idiv(sp_p, N), N)
        sum_sel = (sp_n == row_node).astype(f32)               # pair (b,i,j) -> node (b,i)

        tn_n = lax.broadcasted_iota(jnp.int32, (BN, BNN), 0)
        tn_p = lax.broadcasted_iota(jnp.int32, (BN, BNN), 1)
        col_node = _idiv(tn_p, NN) * N + _imod(tn_p, N)
        tile_sel = (tn_n == col_node).astype(f32)              # node (b,j) -> pair (b,i,j)

        # ---- validity masks from the per-sample human/obj counts (SMEM scalars) ----
        p_row = lax.broadcasted_iota(jnp.int32, (1, BNN), 1)
        b_p = _idiv(p_row, NN)
        i_p = _imod(_idiv(p_row, N), N)
        j_p = _imod(p_row, N)
        n_col = lax.broadcasted_iota(jnp.int32, (BN, 1), 0)
        b_n = _idiv(n_col, N)
        i_n = _imod(n_col, N)
        maskf = jnp.zeros((1, BNN), f32)                       # both endpoints valid
        rowmask_col = jnp.zeros((BN, 1), f32)                  # node valid
        for b in range(B):                                     # B is small and static
            v = human_ref[b] + obj_ref[b]
            maskf = maskf + ((b_p == b) & (i_p < v) & (j_p < v)).astype(f32)
            rowmask_col = rowmask_col + ((b_n == b) & (i_n < v)).astype(f32)

        # ---- activations to channel-first via identity matmuls (MXU "transpose") ----
        edge0 = mm_nt(eye(E), edge_ref[...])                   # (E, B*N*N)
        node = mm_nt(eye(C), node_ref[...])                    # (C, B*N)

        # ---- round-invariant work, hoisted out of the propagation loop ----
        wl1 = wload("wl1"); wl2 = wload("wl2"); wl3 = wload("wl3")
        bl1b = jnp.broadcast_to(bias("bl1"), (LH, BNN))        # pre-broadcast: no per-round
        bl2b = jnp.broadcast_to(bias("bl2"), (LH, BNN))        # broadcast_in_dim re-emission
        bl3b = jnp.broadcast_to(bias("bl3"), (1, BNN))

        # MessageFunction('linear_concat_relu') always reads the ORIGINAL node/edge feats.
        n_msg = mm(mm(wload("wmn"), node), tile_sel)           # (M, B*N*N) node-j contribution
        e_msg = mm(wload("wme"), edge0)                        # (M, B*N*N) edge contribution
        msg = jnp.maximum(n_msg + e_msg + bias("bm"), 0.0)     # (M, B*N*N)
        msg_masked = msg * maskf                               # validity mask folded in ONCE
        if n_rounds > 1:
            # (i,j)->(j,i) swapped copy of the messages, computed ONCE. Per round we then
            # only permute the (1, B*N*N) gate row: 32x fewer MXU MACs than permuting gmsg.
            msg_perm_masked = mm(msg_masked, perm)             # (M == E, B*N*N)
        # GRU hidden-side projection: hidden node state is never written back in the reference.
        hh = mm(wload("whh"), node) + bias("bhh")              # (3C, B*N)

        state = edge0                                          # hidden edge state, round 0
        for r in range(n_rounds):                              # static unroll (R is small)
            # LinkFunction('GraphConv'): stacked 1x1 convs == per-pair MLP over channels.
            h1 = jnp.maximum(mm(wl1, state) + bl1b, 0.0)       # (LH, B*N*N)
            h2 = jnp.maximum(mm(wl2, h1) + bl2b, 0.0)          # (LH, B*N*N)
            adj = (mm(wl3, h2) + bl3b) * maskf                 # (1, B*N*N) adjacency logits
            gate = sigmoid(adj)                                # sigmoid(pred_adj)
            if r + 1 < n_rounds:
                # state[:, (b,i,j)] = (msg*gate*mask)[:, (b,j,i)]
                #                   = msg_perm_masked * (gate @ perm)  (mask is swap-symmetric)
                state = msg_perm_masked * mm(gate, perm)
            else:
                adj_ref[...] = adj
                gmsg = msg_masked * gate                       # (M, B*N*N) gated messages
                m_sum = mm(gmsg, sum_sel)                      # (M, B*N)  per-node aggregate
                gi = mm(wload("wih"), m_sum) + bias("bih")     # (3C, B*N) merged r/z/n proj
                r_g = sigmoid(gi[0:C] + hh[0:C])               # C is a multiple of 8
                z_g = sigmoid(gi[C:2 * C] + hh[C:2 * C])
                n_g = jnp.tanh(gi[2 * C:3 * C] + r_g * hh[2 * C:3 * C])
                h_new = (1.0 - z_g) * n_g + z_g * node         # (C, B*N)
                # ReadoutFunction('fc'); transpose to (B*N, K) on the MXU so the wrapper
                # only needs a bitcast reshape (no post-kernel XLA transpose).
                lab = mm(wload("wro"), h_new) + bias("bro")    # (K, B*N)
                lab_ref[...] = mm_nt(eye(BN), lab) * rowmask_col   # (B*N, K)

    smem = pltpu.MemorySpace.SMEM
    vmem = pltpu.MemorySpace.VMEM
    return pl.pallas_call(
        kernel,
        out_shape=(jax.ShapeDtypeStruct((1, BNN), f32),
                   jax.ShapeDtypeStruct((BN, K), f32)),
        in_specs=[pl.BlockSpec(memory_space=smem),    # human_nums
                  pl.BlockSpec(memory_space=smem),    # obj_nums
                  pl.BlockSpec(memory_space=vmem),    # edge features (BNN, E)
                  pl.BlockSpec(memory_space=vmem),    # node features (BN, C)
                  pl.BlockSpec(memory_space=vmem)],   # packed weight slab (bf16)
        out_specs=(pl.BlockSpec(memory_space=vmem),
                   pl.BlockSpec(memory_space=vmem)),
    )


# ----------------------------------------------------------------------------- wrapper
@functools.partial(jax.jit, static_argnames=("propagate_layers", "dims"))
def gpnn_forward(edge_features, node_features, adj_mat, node_labels,
                 human_nums, obj_nums, weight_slab, propagate_layers, dims):
    """Returns (pred_adj_mat [B,N,N], pred_node_labels [B,N,K]) like GPNN.forward.
    adj_mat / node_labels only define output shapes (as in the reference)."""
    del adj_mat, node_labels
    f32 = jnp.float32
    B, N, _, E = edge_features.shape
    C = node_features.shape[2]
    M, LH, K = dims
    assert M == E, "message_size must equal edge_feature_size (hidden edge state update)"
    assert C % 8 == 0, "GRU gate row-slices assume node_feature_size is a multiple of 8"

    call = _build_gpnn_call(propagate_layers, B, N, E, C, M, LH, K)
    # Only bitcast reshapes here: transposes, masks and selection/permutation matrices
    # are all built in-kernel; weight packing happened once at init (outside jit).
    adj_flat, lab_flat = call(
        human_nums.astype(jnp.int32), obj_nums.astype(jnp.int32),
        edge_features.astype(f32).reshape(B * N * N, E),
        node_features.astype(f32).reshape(B * N, C),
        weight_slab)
    return adj_flat.reshape(B, N, N), lab_flat.reshape(B, N, K)


# ----------------------------------------------------------------------------- reference
def reference_forward(edge_features, node_features, human_nums, obj_nums, p, R):
    """Pure NumPy re-implementation following the PyTorch code structure exactly."""
    ef = np.asarray(edge_features, np.float32)          # [B, N, N, E]
    nf = np.asarray(node_features, np.float32)          # [B, N, C]
    B, N, _, E = ef.shape
    K = p["wro"].shape[1]
    efp = ef.transpose(0, 3, 1, 2)                      # [B, E, N, N]
    nfp = nf.transpose(0, 2, 1)                         # [B, C, N]
    pred_adj = np.zeros((B, N, N), np.float32)
    pred_lab = np.zeros((B, N, K), np.float32)
    sig = lambda x: 1.0 / (1.0 + np.exp(-x))
    relu = lambda x: np.maximum(x, 0.0)

    for b in range(B):
        v = int(human_nums[b]) + int(obj_nums[b])
        h_edge = [efp[b].copy() for _ in range(R + 1)]
        h_node = [nfp[b].copy() for _ in range(R + 1)]   # never updated (mirrors forward)
        for r in range(R):
            x = h_edge[r][:, :v, :v]
            h1 = relu(np.einsum("co,cij->oij", p["wl1"], x) + p["bl1"].reshape(-1, 1, 1))
            h2 = relu(np.einsum("co,cij->oij", p["wl2"], h1) + p["bl2"].reshape(-1, 1, 1))
            a = np.einsum("co,cij->oij", p["wl3"], h2) + p["bl3"].reshape(-1, 1, 1)
            pred_adj[b, :v, :v] = a[0]
            sig_adj = sig(pred_adj[b])
            for i in range(v):
                h_v = h_node[r][:, i]                                   # [C]
                h_w = h_node[r][:, :v]                                  # [C, v]
                e_vw = efp[b, :, i, :v]                                 # [E, v]
                m = relu(p["wmn"].T @ h_w + p["wme"].T @ e_vw + p["bm"].reshape(-1, 1))
                m = sig_adj[i, :v][None, :] * m                         # [M, v]
                h_edge[r + 1][:, :v, i] = m
                m_sum = m.sum(axis=1)                                   # [M]
                rg = sig(p["wir"].T @ m_sum + p["bir"].ravel() + p["whr"].T @ h_v + p["bhr"].ravel())
                zg = sig(p["wiz"].T @ m_sum + p["biz"].ravel() + p["whz"].T @ h_v + p["bhz"].ravel())
                ng = np.tanh(p["win"].T @ m_sum + p["bin"].ravel() +
                             rg * (p["whn"].T @ h_v + p["bhn"].ravel()))
                h_new = (1.0 - zg) * ng + zg * h_v
                if r == R - 1:
                    pred_lab[b, i, :] = p["wro"].T @ h_new + p["bro"].ravel()
    return pred_adj, pred_lab


# ----------------------------------------------------------------------------- main
if __name__ == "__main__":
    B, N = 2, 8          # batch, max nodes per graph (B*N*N = 128 -> one full lane width)
    E = 32               # edge_feature_size (== message_size, resize_feature_to_message_size=False)
    M = 32               # message_size
    C = 24               # node_feature_size (GRU hidden size)
    LH = 16              # link_hidden_size (link_hidden_layers = 3)
    K = 10               # hoi_classes
    R = 2                # propagate_layers

    key = jax.random.PRNGKey(0)
    keys = iter(jax.random.split(key, 40))

    def rnd(shape, scale=0.2):
        return (scale * jax.random.normal(next(keys), shape)).astype(jnp.float32)

    params = {
        "wl1": rnd((E, LH)), "bl1": rnd((1, LH), 0.1),
        "wl2": rnd((LH, LH)), "bl2": rnd((1, LH), 0.1),
        "wl3": rnd((LH, 1)), "bl3": rnd((1, 1), 0.1),
        "wmn": rnd((C, M)), "wme": rnd((E, M)), "bm": rnd((1, M), 0.1),
        "wir": rnd((M, C)), "wiz": rnd((M, C)), "win": rnd((M, C)),
        "whr": rnd((C, C)), "whz": rnd((C, C)), "whn": rnd((C, C)),
        "bir": rnd((1, C), 0.1), "biz": rnd((1, C), 0.1), "bin": rnd((1, C), 0.1),
        "bhr": rnd((1, C), 0.1), "bhz": rnd((1, C), 0.1), "bhn": rnd((1, C), 0.1),
        "wro": rnd((C, K)), "bro": rnd((1, K), 0.1),
    }

    edge_features = (0.5 * jax.random.normal(next(keys), (B, N, N, E))).astype(jnp.float32)
    node_features = (0.5 * jax.random.normal(next(keys), (B, N, C))).astype(jnp.float32)
    adj_mat = jnp.zeros((B, N, N), jnp.float32)
    node_labels = jnp.zeros((B, N, K), jnp.float32)
    human_nums = jnp.array([3, 4], jnp.int32)
    obj_nums = jnp.array([2, 4], jnp.int32)   # valid nodes: [5, 8]

    # One-time weight packing (outside jit / outside the per-call path).
    weight_slab = pack_gpnn_weights(params, E, C, M, LH, K)

    pred_adj, pred_labels = gpnn_forward(edge_features, node_features, adj_mat, node_labels,
                                         human_nums, obj_nums, weight_slab,
                                         propagate_layers=R, dims=(M, LH, K))
    jax.block_until_ready((pred_adj, pred_labels))

    # correctness check against a loop-level NumPy port of the PyTorch forward
    np_params = {k: np.asarray(v) for k, v in params.items()}
    ref_adj, ref_lab = reference_forward(np.asarray(edge_features), np.asarray(node_features),
                                         [3, 4], [2, 4], np_params, R)
    assert np.allclose(np.asarray(pred_adj), ref_adj, atol=5e-2, rtol=5e-2)
    assert np.allclose(np.asarray(pred_labels), ref_lab, atol=5e-2, rtol=5e-2)

    print("KERNEL_OK")
</pallas_src>

<mosaic_0001>
module attributes {stable_mosaic.version = 11 : i64} {
  func.func @kernel(%arg0: memref<2xi32, #tpu.memory_space<smem>>, %arg1: memref<2xi32, #tpu.memory_space<smem>>, %arg2: memref<128x32xf32, #tpu.memory_space<vmem>>, %arg3: memref<16x24xf32, #tpu.memory_space<vmem>>, %arg4: memref<368x32xbf16, #tpu.memory_space<vmem>>, %arg5: memref<1x128xf32, #tpu.memory_space<vmem>>, %arg6: memref<16x10xf32, #tpu.memory_space<vmem>>) attributes {dimension_semantics = [], scalar_prefetch = 0 : i64, scratch_operands = 0 : i64, tpu.core_type = #tpu.core_type<tc>} {
    %c288 = arith.constant 288 : index
    %c0 = arith.constant 0 : index
    %0 = vector.load %arg4[%c288, %c0] : memref<368x32xbf16, #tpu.memory_space<vmem>>, vector<80x32xbf16>
    %1 = arith.extf %0 : vector<80x32xbf16> to vector<80x32xf32>
    %2 = tpu.iota {dimensions = array<i32: 0>} : vector<128x128xi32>
    %3 = tpu.iota {dimensions = array<i32: 1>} : vector<128x128xi32>
    %c6_i32 = arith.constant 6 : i32
    %4 = vector.broadcast %c6_i32 : i32 to vector<128x128xi32>
    %5 = arith.shrsi %2, %4 : vector<128x128xi32>
    %c64_i32 = arith.constant 64 : i32
    %6 = vector.broadcast %c64_i32 : i32 to vector<128x128xi32>
    %7 = arith.muli %5, %6 : vector<128x128xi32>
    %c7_i32 = arith.constant 7 : i32
    %8 = vector.broadcast %c7_i32 : i32 to vector<128x128xi32>
    %9 = arith.andi %2, %8 : vector<128x128xi32>
    %c8_i32 = arith.constant 8 : i32
    %10 = vector.broadcast %c8_i32 : i32 to vector<128x128xi32>
    %11 = arith.muli %9, %10 : vector<128x128xi32>
    %12 = arith.addi %7, %11 : vector<128x128xi32>
    %c3_i32 = arith.constant 3 : i32
    %13 = vector.broadcast %c3_i32 : i32 to vector<128x128xi32>
    %14 = arith.shrsi %2, %13 : vector<128x128xi32>
    %c7_i32_0 = arith.constant 7 : i32
    %15 = vector.broadcast %c7_i32_0 : i32 to vector<128x128xi32>
    %16 = arith.andi %14, %15 : vector<128x128xi32>
    %17 = arith.addi %12, %16 : vector<128x128xi32>
    %18 = arith.cmpi eq, %3, %17 : vector<128x128xi32>
    %19 = arith.extui %18 : vector<128x128xi1> to vector<128x128xi32>
    %20 = arith.sitofp %19 : vector<128x128xi32> to vector<128x128xf32>
    %21 = tpu.iota {dimensions = array<i32: 0>} : vector<128x16xi32>
    %22 = tpu.iota {dimensions = array<i32: 1>} : vector<128x16xi32>
    %c6_i32_1 = arith.constant 6 : i32
    %23 = vector.broadcast %c6_i32_1 : i32 to vector<128x16xi32>
    %24 = arith.shrsi %21, %23 : vector<128x16xi32>
    %c8_i32_2 = arith.constant 8 : i32
    %25 = vector.broadcast %c8_i32_2 : i32 to vector<128x16xi32>
    %26 = arith.muli %24, %25 : vector<128x16xi32>
    %c3_i32_3 = arith.constant 3 : i32
    %27 = vector.broadcast %c3_i32_3 : i32 to vector<128x16xi32>
    %28 = arith.shrsi %21, %27 : vector<128x16xi32>
    %c7_i32_4 = arith.constant 7 : i32
    %29 = vector.broadcast %c7_i32_4 : i32 to vector<128x16xi32>
    %30 = arith.andi %28, %29 : vector<128x16xi32>
    %31 = arith.addi %26, %30 : vector<128x16xi32>
    %32 = arith.cmpi eq, %22, %31 : vector<128x16xi32>
    %33 = arith.extui %32 : vector<128x16xi1> to vector<128x16xi32>
    %34 = arith.sitofp %33 : vector<128x16xi32> to vector<128x16xf32>
    %35 = tpu.iota {dimensions = array<i32: 0>} : vector<16x128xi32>
    %36 = tpu.iota {dimensions = array<i32: 1>} : vector<16x128xi32>
    %c6_i32_5 = arith.constant 6 : i32
    %37 = vector.broadcast %c6_i32_5 : i32 to vector<16x128xi32>
    %38 = arith.shrsi %36, %37 : vector<16x128xi32>
    %c8_i32_6 = arith.constant 8 : i32
    %39 = vector.broadcast %c8_i32_6 : i32 to vector<16x128xi32>
    %40 = arith.muli %38, %39 : vector<16x128xi32>
    %c7_i32_7 = arith.constant 7 : i32
    %41 = vector.broadcast %c7_i32_7 : i32 to vector<16x128xi32>
    %42 = arith.andi %36, %41 : vector<16x128xi32>
    %43 = arith.addi %40, %42 : vector<16x128xi32>
    %44 = arith.cmpi eq, %35, %43 : vector<16x128xi32>
    %45 = arith.extui %44 : vector<16x128xi1> to vector<16x128xi32>
    %46 = arith.sitofp %45 : vector<16x128xi32> to vector<16x128xf32>
    %47 = tpu.iota {dimensions = array<i32: 1>} : vector<1x128xi32>
    %c6_i32_8 = arith.constant 6 : i32
    %48 = vector.broadcast %c6_i32_8 : i32 to vector<1x128xi32>
    %49 = arith.shrsi %47, %48 : vector<1x128xi32>
    %c3_i32_9 = arith.constant 3 : i32
    %50 = vector.broadcast %c3_i32_9 : i32 to vector<1x128xi32>
    %51 = arith.shrsi %47, %50 : vector<1x128xi32>
    %c7_i32_10 = arith.constant 7 : i32
    %52 = vector.broadcast %c7_i32_10 : i32 to vector<1x128xi32>
    %53 = arith.andi %51, %52 : vector<1x128xi32>
    %c7_i32_11 = arith.constant 7 : i32
    %54 = vector.broadcast %c7_i32_11 : i32 to vector<1x128xi32>
    %55 = arith.andi %47, %54 : vector<1x128xi32>
    %56 = tpu.iota {dimensions = array<i32: 0>} : vector<16x1xi32>
    %c3_i32_12 = arith.constant 3 : i32
    %57 = vector.broadcast %c3_i32_12 : i32 to vector<16x1xi32>
    %58 = arith.shrsi %56, %57 : vector<16x1xi32>
    %c7_i32_13 = arith.constant 7 : i32
    %59 = vector.broadcast %c7_i32_13 : i32 to vector<16x1xi32>
    %60 = arith.andi %56, %59 : vector<16x1xi32>
    %cst = arith.constant 0.000000e+00 : f32
    %61 = vector.broadcast %cst : f32 to vector<1x128xf32>
    %cst_14 = arith.constant 0.000000e+00 : f32
    %62 = vector.broadcast %cst_14 : f32 to vector<16x1xf32>
    %c0_15 = arith.constant 0 : index
    %63 = memref.load %arg0[%c0_15] : memref<2xi32, #tpu.memory_space<smem>>
    %c0_16 = arith.constant 0 : index
    %64 = memref.load %arg1[%c0_16] : memref<2xi32, #tpu.memory_space<smem>>
    %65 = arith.addi %63, %64 : i32
    %c0_i32 = arith.constant 0 : i32
    %66 = vector.broadcast %c0_i32 : i32 to vector<1x128xi32>
    %67 = arith.cmpi eq, %49, %66 : vector<1x128xi32>
    %68 = vector.broadcast %65 : i32 to vector<1x128xi32>
    %69 = arith.cmpi slt, %53, %68 : vector<1x128xi32>
    %70 = arith.andi %67, %69 : vector<1x128xi1>
    %71 = vector.broadcast %65 : i32 to vector<1x128xi32>
    %72 = arith.cmpi slt, %55, %71 : vector<1x128xi32>
    %73 = arith.andi %70, %72 : vector<1x128xi1>
    %74 = arith.extui %73 : vector<1x128xi1> to vector<1x128xi32>
    %75 = arith.sitofp %74 : vector<1x128xi32> to vector<1x128xf32>
    %76 = arith.addf %61, %75 : vector<1x128xf32>
    %c0_i32_17 = arith.constant 0 : i32
    %77 = vector.broadcast %c0_i32_17 : i32 to vector<16x1xi32>
    %78 = arith.cmpi eq, %58, %77 : vector<16x1xi32>
    %79 = vector.broadcast %65 : i32 to vector<16x1xi32>
    %80 = arith.cmpi slt, %60, %79 : vector<16x1xi32>
    %81 = arith.andi %78, %80 : vector<16x1xi1>
    %82 = arith.extui %81 : vector<16x1xi1> to vector<16x1xi32>
    %83 = arith.sitofp %82 : vector<16x1xi32> to vector<16x1xf32>
    %84 = arith.addf %62, %83 : vector<16x1xf32>
    %c1 = arith.constant 1 : index
    %85 = memref.load %arg0[%c1] : memref<2xi32, #tpu.memory_space<smem>>
    %c1_18 = arith.constant 1 : index
    %86 = memref.load %arg1[%c1_18] : memref<2xi32, #tpu.memory_space<smem>>
    %87 = arith.addi %85, %86 : i32
    %c1_i32 = arith.constant 1 : i32
    %88 = vector.broadcast %c1_i32 : i32 to vector<1x128xi32>
    %89 = arith.cmpi eq, %49, %88 : vector<1x128xi32>
    %90 = vector.broadcast %87 : i32 to vector<1x128xi32>
    %91 = arith.cmpi slt, %53, %90 : vector<1x128xi32>
    %92 = arith.andi %89, %91 : vector<1x128xi1>
    %93 = vector.broadcast %87 : i32 to vector<1x128xi32>
    %94 = arith.cmpi slt, %55, %93 : vector<1x128xi32>
    %95 = arith.andi %92, %94 : vector<1x128xi1>
    %96 = arith.extui %95 : vector<1x128xi1> to vector<1x128xi32>
    %97 = arith.sitofp %96 : vector<1x128xi32> to vector<1x128xf32>
    %98 = arith.addf %76, %97 : vector<1x128xf32>
    %c1_i32_19 = arith.constant 1 : i32
    %99 = vector.broadcast %c1_i32_19 : i32 to vector<16x1xi32>
    %100 = arith.cmpi eq, %58, %99 : vector<16x1xi32>
    %101 = vector.broadcast %87 : i32 to vector<16x1xi32>
    %102 = arith.cmpi slt, %60, %101 : vector<16x1xi32>
    %103 = arith.andi %100, %102 : vector<16x1xi1>
    %104 = arith.extui %103 : vector<16x1xi1> to vector<16x1xi32>
    %105 = arith.sitofp %104 : vector<16x1xi32> to vector<16x1xf32>
    %106 = arith.addf %84, %105 : vector<16x1xf32>
    %107 = tpu.iota {dimensions = array<i32: 0>} : vector<32x32xi32>
    %108 = tpu.iota {dimensions = array<i32: 1>} : vector<32x32xi32>
    %109 = arith.cmpi eq, %107, %108 : vector<32x32xi32>
    %110 = arith.extui %109 : vector<32x32xi1> to vector<32x32xi32>
    %111 = arith.sitofp %110 : vector<32x32xi32> to vector<32x32xf32>
    %c0_20 = arith.constant 0 : index
    %c0_21 = arith.constant 0 : index
    %112 = vector.load %arg2[%c0_20, %c0_21] : memref<128x32xf32, #tpu.memory_space<vmem>>, vector<128x32xf32>
    %cst_22 = arith.constant dense<0.000000e+00> : vector<32x128xf32>
    %113 = tpu.matmul %111, %112, %cst_22 {dimension_numbers = #tpu.dot_dimension_numbers<[1], [1], [0], [0], [0, 0, 1, 0], [], []>} : vector<32x32xf32>, vector<128x32xf32>, vector<32x128xf32> -> vector<32x128xf32>
    %114 = tpu.iota {dimensions = array<i32: 0>} : vector<24x24xi32>
    %115 = tpu.iota {dimensions = array<i32: 1>} : vector<24x24xi32>
    %116 = arith.cmpi eq, %114, %115 : vector<24x24xi32>
    %117 = arith.extui %116 : vector<24x24xi1> to vector<24x24xi32>
    %118 = arith.sitofp %117 : vector<24x24xi32> to vector<24x24xf32>
    %c0_23 = arith.constant 0 : index
    %c0_24 = arith.constant 0 : index
    %119 = vector.load %arg3[%c0_23, %c0_24] : memref<16x24xf32, #tpu.memory_space<vmem>>, vector<16x24xf32>
    %cst_25 = arith.constant dense<0.000000e+00> : vector<24x16xf32>
    %120 = tpu.matmul %118, %119, %cst_25 {dimension_numbers = #tpu.dot_dimension_numbers<[1], [1], [0], [0], [0, 0, 1, 0], [], []>} : vector<24x24xf32>, vector<16x24xf32>, vector<24x16xf32> -> vector<24x16xf32>
    %c0_26 = arith.constant 0 : index
    %c0_27 = arith.constant 0 : index
    %121 = vector.load %arg4[%c0_26, %c0_27] : memref<368x32xbf16, #tpu.memory_space<vmem>>, vector<16x32xbf16>
    %122 = arith.extf %121 : vector<16x32xbf16> to vector<16x32xf32>
    %c16 = arith.constant 16 : index
    %c0_28 = arith.constant 0 : index
    %123 = vector.load %arg4[%c16, %c0_28] : memref<368x32xbf16, #tpu.memory_space<vmem>>, vector<16x32xbf16>
    %124 = arith.extf %123 : vector<16x32xbf16> to vector<16x32xf32>
    %125 = vector.extract_strided_slice %124 {offsets = [0, 0], sizes = [16, 16], strides = [1, 1]} : vector<16x32xf32> to vector<16x16xf32>
    %c32 = arith.constant 32 : index
    %c0_29 = arith.constant 0 : index
    %126 = vector.load %arg4[%c32, %c0_29] : memref<368x32xbf16, #tpu.memory_space<vmem>>, vector<16x32xbf16>
    %127 = arith.extf %126 : vector<16x32xbf16> to vector<16x32xf32>
    %128 = vector.extract_strided_slice %127 {offsets = [0, 0], sizes = [1, 16], strides = [1, 1]} : vector<16x32xf32> to vector<1x16xf32>
    %129 = vector.extract_strided_slice %1 {offsets = [0, 3], sizes = [16, 1], strides = [1, 1]} : vector<80x32xf32> to vector<16x1xf32>
    %130 = vector.shape_cast %129 : vector<16x1xf32> to vector<16x1xf32>
    %131 = vector.broadcast %130 : vector<16x1xf32> to vector<16x128xf32>
    %132 = vector.extract_strided_slice %1 {offsets = [0, 4], sizes = [16, 1], strides = [1, 1]} : vector<80x32xf32> to vector<16x1xf32>
    %133 = vector.shape_cast %132 : vector<16x1xf32> to vector<16x1xf32>
    %134 = vector.broadcast %133 : vector<16x1xf32> to vector<16x128xf32>
    %135 = vector.extract_strided_slice %1 {offsets = [0, 5], sizes = [1, 1], strides = [1, 1]} : vector<80x32xf32> to vector<1x1xf32>
    %136 = vector.shape_cast %135 : vector<1x1xf32> to vector<1x1xf32>
    %137 = vector.broadcast %136 : vector<1x1xf32> to vector<1x128xf32>
    %c48 = arith.constant 48 : index
    %c0_30 = arith.constant 0 : index
    %138 = vector.load %arg4[%c48, %c0_30] : memref<368x32xbf16, #tpu.memory_space<vmem>>, vector<32x32xbf16>
    %139 = arith.extf %138 : vector<32x32xbf16> to vector<32x32xf32>
    %140 = vector.extract_strided_slice %139 {offsets = [0, 0], sizes = [32, 24], strides = [1, 1]} : vector<32x32xf32> to vector<32x24xf32>
    %cst_31 = arith.constant dense<0.000000e+00> : vector<32x16xf32>
    %141 = tpu.matmul %140, %120, %cst_31 {dimension_numbers = #tpu.dot_dimension_numbers<[1], [0], [0], [1], [0, 0, 1, 1], [], []>} : vector<32x24xf32>, vector<24x16xf32>, vector<32x16xf32> -> vector<32x16xf32>
    %cst_32 = arith.constant dense<0.000000e+00> : vector<32x128xf32>
    %142 = tpu.matmul %141, %46, %cst_32 {dimension_numbers = #tpu.dot_dimension_numbers<[1], [0], [0], [1], [0, 0, 1, 1], [], []>} : vector<32x16xf32>, vector<16x128xf32>, vector<32x128xf32> -> vector<32x128xf32>
    %c80 = arith.constant 80 : index
    %c0_33 = arith.constant 0 : index
    %143 = vector.load %arg4[%c80, %c0_33] : memref<368x32xbf16, #tpu.memory_space<vmem>>, vector<32x32xbf16>
    %144 = arith.extf %143 : vector<32x32xbf16> to vector<32x32xf32>
    %cst_34 = arith.constant dense<0.000000e+00> : vector<32x128xf32>
    %145 = tpu.matmul %144, %113, %cst_34 {dimension_numbers = #tpu.dot_dimension_numbers<[1], [0], [0], [1], [0, 0, 1, 1], [], []>} : vector<32x32xf32>, vector<32x128xf32>, vector<32x128xf32> -> vector<32x128xf32>
    %146 = arith.addf %142, %145 : vector<32x128xf32>
    %147 = vector.extract_strided_slice %1 {offsets = [0, 2], sizes = [32, 1], strides = [1, 1]} : vector<80x32xf32> to vector<32x1xf32>
    %148 = vector.broadcast %147 : vector<32x1xf32> to vector<32x128xf32>
    %149 = arith.addf %146, %148 : vector<32x128xf32>
    %cst_35 = arith.constant 0.000000e+00 : f32
    %150 = vector.broadcast %cst_35 : f32 to vector<32x128xf32>
    %151 = arith.maximumf %149, %150 : vector<32x128xf32>
    %152 = vector.broadcast %98 : vector<1x128xf32> to vector<32x128xf32>
    %153 = arith.mulf %151, %152 : vector<32x128xf32>
    %cst_36 = arith.constant dense<0.000000e+00> : vector<32x128xf32>
    %154 = tpu.matmul %153, %20, %cst_36 {dimension_numbers = #tpu.dot_dimension_numbers<[1], [0], [0], [1], [0, 0, 1, 1], [], []>} : vector<32x128xf32>, vector<128x128xf32>, vector<32x128xf32> -> vector<32x128xf32>
    %c192 = arith.constant 192 : index
    %c0_37 = arith.constant 0 : index
    %155 = vector.load %arg4[%c192, %c0_37] : memref<368x32xbf16, #tpu.memory_space<vmem>>, vector<80x32xbf16>
    %156 = arith.extf %155 : vector<80x32xbf16> to vector<80x32xf32>
    %157 = vector.extract_strided_slice %156 {offsets = [0, 0], sizes = [72, 24], strides = [1, 1]} : vector<80x32xf32> to vector<72x24xf32>
    %cst_38 = arith.constant dense<0.000000e+00> : vector<72x16xf32>
    %158 = tpu.matmul %157, %120, %cst_38 {dimension_numbers = #tpu.dot_dimension_numbers<[1], [0], [0], [1], [0, 0, 1, 1], [], []>} : vector<72x24xf32>, vector<24x16xf32>, vector<72x16xf32> -> vector<72x16xf32>
    %159 = vector.extract_strided_slice %1 {offsets = [0, 1], sizes = [72, 1], strides = [1, 1]} : vector<80x32xf32> to vector<72x1xf32>
    %160 = vector.broadcast %159 : vector<72x1xf32> to vector<72x16xf32>
    %161 = arith.addf %158, %160 : vector<72x16xf32>
    %cst_39 = arith.constant dense<0.000000e+00> : vector<16x128xf32>
    %162 = tpu.matmul %122, %113, %cst_39 {dimension_numbers = #tpu.dot_dimension_numbers<[1], [0], [0], [1], [0, 0, 1, 1], [], []>} : vector<16x32xf32>, vector<32x128xf32>, vector<16x128xf32> -> vector<16x128xf32>
    %163 = arith.addf %162, %131 : vector<16x128xf32>
    %cst_40 = arith.constant 0.000000e+00 : f32
    %164 = vector.broadcast %cst_40 : f32 to vector<16x128xf32>
    %165 = arith.maximumf %163, %164 : vector<16x128xf32>
    %cst_41 = arith.constant dense<0.000000e+00> : vector<16x128xf32>
    %166 = tpu.matmul %125, %165, %cst_41 {dimension_numbers = #tpu.dot_dimension_numbers<[1], [0], [0], [1], [0, 0, 1, 1], [], []>} : vector<16x16xf32>, vector<16x128xf32>, vector<16x128xf32> -> vector<16x128xf32>
    %167 = arith.addf %166, %134 : vector<16x128xf32>
    %cst_42 = arith.constant 0.000000e+00 : f32
    %168 = vector.broadcast %cst_42 : f32 to vector<16x128xf32>
    %169 = arith.maximumf %167, %168 : vector<16x128xf32>
    %cst_43 = arith.constant dense<0.000000e+00> : vector<1x128xf32>
    %170 = tpu.matmul %128, %169, %cst_43 {dimension_numbers = #tpu.dot_dimension_numbers<[1], [0], [0], [1], [0, 0, 1, 1], [], []>} : vector<1x16xf32>, vector<16x128xf32>, vector<1x128xf32> -> vector<1x128xf32>
    %171 = arith.addf %170, %137 : vector<1x128xf32>
    %172 = arith.mulf %171, %98 : vector<1x128xf32>
    %cst_44 = arith.constant 5.000000e-01 : f32
    %173 = vector.broadcast %cst_44 : f32 to vector<1x128xf32>
    %174 = arith.mulf %173, %172 : vector<1x128xf32>
    %175 = math.tanh %174 : vector<1x128xf32>
    %cst_45 = arith.constant 1.000000e+00 : f32
    %176 = vector.broadcast %cst_45 : f32 to vector<1x128xf32>
    %177 = arith.addf %175, %176 : vector<1x128xf32>
    %cst_46 = arith.constant 5.000000e-01 : f32
    %178 = vector.broadcast %cst_46 : f32 to vector<1x128xf32>
    %179 = arith.mulf %178, %177 : vector<1x128xf32>
    %cst_47 = arith.constant dense<0.000000e+00> : vector<1x128xf32>
    %180 = tpu.matmul %179, %20, %cst_47 {dimension_numbers = #tpu.dot_dimension_numbers<[1], [0], [0], [1], [0, 0, 1, 1], [], []>} : vector<1x128xf32>, vector<128x128xf32>, vector<1x128xf32> -> vector<1x128xf32>
    %181 = vector.broadcast %180 : vector<1x128xf32> to vector<32x128xf32>
    %182 = arith.mulf %154, %181 : vector<32x128xf32>
    %cst_48 = arith.constant dense<0.000000e+00> : vector<16x128xf32>
    %183 = tpu.matmul %122, %182, %cst_48 {dimension_numbers = #tpu.dot_dimension_numbers<[1], [0], [0], [1], [0, 0, 1, 1], [], []>} : vector<16x32xf32>, vector<32x128xf32>, vector<16x128xf32> -> vector<16x128xf32>
    %184 = arith.addf %183, %131 : vector<16x128xf32>
    %cst_49 = arith.constant 0.000000e+00 : f32
    %185 = vector.broadcast %cst_49 : f32 to vector<16x128xf32>
    %186 = arith.maximumf %184, %185 : vector<16x128xf32>
    %cst_50 = arith.constant dense<0.000000e+00> : vector<16x128xf32>
    %187 = tpu.matmul %125, %186, %cst_50 {dimension_numbers = #tpu.dot_dimension_numbers<[1], [0], [0], [1], [0, 0, 1, 1], [], []>} : vector<16x16xf32>, vector<16x128xf32>, vector<16x128xf32> -> vector<16x128xf32>
    %188 = arith.addf %187, %134 : vector<16x128xf32>
    %cst_51 = arith.constant 0.000000e+00 : f32
    %189 = vector.broadcast %cst_51 : f32 to vector<16x128xf32>
    %190 = arith.maximumf %188, %189 : vector<16x128xf32>
    %cst_52 = arith.constant dense<0.000000e+00> : vector<1x128xf32>
    %191 = tpu.matmul %128, %190, %cst_52 {dimension_numbers = #tpu.dot_dimension_numbers<[1], [0], [0], [1], [0, 0, 1, 1], [], []>} : vector<1x16xf32>, vector<16x128xf32>, vector<1x128xf32> -> vector<1x128xf32>
    %192 = arith.addf %191, %137 : vector<1x128xf32>
    %193 = arith.mulf %192, %98 : vector<1x128xf32>
    %cst_53 = arith.constant 5.000000e-01 : f32
    %194 = vector.broadcast %cst_53 : f32 to vector<1x128xf32>
    %195 = arith.mulf %194, %193 : vector<1x128xf32>
    %196 = math.tanh %195 : vector<1x128xf32>
    %cst_54 = arith.constant 1.000000e+00 : f32
    %197 = vector.broadcast %cst_54 : f32 to vector<1x128xf32>
    %198 = arith.addf %196, %197 : vector<1x128xf32>
    %cst_55 = arith.constant 5.000000e-01 : f32
    %199 = vector.broadcast %cst_55 : f32 to vector<1x128xf32>
    %200 = arith.mulf %199, %198 : vector<1x128xf32>
    %c0_56 = arith.constant 0 : index
    %c0_57 = arith.constant 0 : index
    %201 = vector.load %arg5[%c0_56, %c0_57] : memref<1x128xf32, #tpu.memory_space<vmem>>, vector<1x128xf32>
    tpu.vector_store %arg5[%c0_56, %c0_57], %193 {strides = array<i32>} : memref<1x128xf32, #tpu.memory_space<vmem>>, vector<1x128xf32>,
    %202 = vector.broadcast %200 : vector<1x128xf32> to vector<32x128xf32>
    %203 = arith.mulf %153, %202 : vector<32x128xf32>
    %cst_58 = arith.constant dense<0.000000e+00> : vector<32x16xf32>
    %204 = tpu.matmul %203, %34, %cst_58 {dimension_numbers = #tpu.dot_dimension_numbers<[1], [0], [0], [1], [0, 0, 1, 1], [], []>} : vector<32x128xf32>, vector<128x16xf32>, vector<32x16xf32> -> vector<32x16xf32>
    %c112 = arith.constant 112 : index
    %c0_59 = arith.constant 0 : index
    %205 = vector.load %arg4[%c112, %c0_59] : memref<368x32xbf16, #tpu.memory_space<vmem>>, vector<80x32xbf16>
    %206 = arith.extf %205 : vector<80x32xbf16> to vector<80x32xf32>
    %207 = vector.extract_strided_slice %206 {offsets = [0, 0], sizes = [72, 32], strides = [1, 1]} : vector<80x32xf32> to vector<72x32xf32>
    %cst_60 = arith.constant dense<0.000000e+00> : vector<72x16xf32>
    %208 = tpu.matmul %207, %204, %cst_60 {dimension_numbers = #tpu.dot_dimension_numbers<[1], [0], [0], [1], [0, 0, 1, 1], [], []>} : vector<72x32xf32>, vector<32x16xf32>, vector<72x16xf32> -> vector<72x16xf32>
    %209 = vector.extract_strided_slice %1 {offsets = [0, 0], sizes = [72, 1], strides = [1, 1]} : vector<80x32xf32> to vector<72x1xf32>
    %210 = vector.broadcast %209 : vector<72x1xf32> to vector<72x16xf32>
    %211 = arith.addf %208, %210 : vector<72x16xf32>
    %212 = vector.extract_strided_slice %211 {offsets = [0, 0], sizes = [24, 16], strides = [1, 1]} : vector<72x16xf32> to vector<24x16xf32>
    %213 = vector.extract_strided_slice %161 {offsets = [0, 0], sizes = [24, 16], strides = [1, 1]} : vector<72x16xf32> to vector<24x16xf32>
    %214 = arith.addf %212, %213 : vector<24x16xf32>
    %cst_61 = arith.constant 5.000000e-01 : f32
    %215 = vector.broadcast %cst_61 : f32 to vector<24x16xf32>
    %216 = arith.mulf %215, %214 : vector<24x16xf32>
    %217 = math.tanh %216 : vector<24x16xf32>
    %cst_62 = arith.constant 1.000000e+00 : f32
    %218 = vector.broadcast %cst_62 : f32 to vector<24x16xf32>
    %219 = arith.addf %217, %218 : vector<24x16xf32>
    %cst_63 = arith.constant 5.000000e-01 : f32
    %220 = vector.broadcast %cst_63 : f32 to vector<24x16xf32>
    %221 = arith.mulf %220, %219 : vector<24x16xf32>
    %222 = vector.extract_strided_slice %211 {offsets = [24, 0], sizes = [24, 16], strides = [1, 1]} : vector<72x16xf32> to vector<24x16xf32>
    %223 = vector.extract_strided_slice %161 {offsets = [24, 0], sizes = [24, 16], strides = [1, 1]} : vector<72x16xf32> to vector<24x16xf32>
    %224 = arith.addf %222, %223 : vector<24x16xf32>
    %cst_64 = arith.constant 5.000000e-01 : f32
    %225 = vector.broadcast %cst_64 : f32 to vector<24x16xf32>
    %226 = arith.mulf %225, %224 : vector<24x16xf32>
    %227 = math.tanh %226 : vector<24x16xf32>
    %cst_65 = arith.constant 1.000000e+00 : f32
    %228 = vector.broadcast %cst_65 : f32 to vector<24x16xf32>
    %229 = arith.addf %227, %228 : vector<24x16xf32>
    %cst_66 = arith.constant 5.000000e-01 : f32
    %230 = vector.broadcast %cst_66 : f32 to vector<24x16xf32>
    %231 = arith.mulf %230, %229 : vector<24x16xf32>
    %232 = vector.extract_strided_slice %211 {offsets = [48, 0], sizes = [24, 16], strides = [1, 1]} : vector<72x16xf32> to vector<24x16xf32>
    %233 = vector.extract_strided_slice %161 {offsets = [48, 0], sizes = [24, 16], strides = [1, 1]} : vector<72x16xf32> to vector<24x16xf32>
    %234 = arith.mulf %221, %233 : vector<24x16xf32>
    %235 = arith.addf %232, %234 : vector<24x16xf32>
    %236 = math.tanh %235 : vector<24x16xf32>
    %cst_67 = arith.constant 1.000000e+00 : f32
    %237 = vector.broadcast %cst_67 : f32 to vector<24x16xf32>
    %238 = arith.subf %237, %231 : vector<24x16xf32>
    %239 = arith.mulf %238, %236 : vector<24x16xf32>
    %240 = arith.mulf %231, %120 : vector<24x16xf32>
    %241 = arith.addf %239, %240 : vector<24x16xf32>
    %c272 = arith.constant 272 : index
    %c0_68 = arith.constant 0 : index
    %242 = vector.load %arg4[%c272, %c0_68] : memref<368x32xbf16, #tpu.memory_space<vmem>>, vector<16x32xbf16>
    %243 = arith.extf %242 : vector<16x32xbf16> to vector<16x32xf32>
    %244 = vector.extract_strided_slice %243 {offsets = [0, 0], sizes = [10, 24], strides = [1, 1]} : vector<16x32xf32> to vector<10x24xf32>
    %cst_69 = arith.constant dense<0.000000e+00> : vector<10x16xf32>
    %245 = tpu.matmul %244, %241, %cst_69 {dimension_numbers = #tpu.dot_dimension_numbers<[1], [0], [0], [1], [0, 0, 1, 1], [], []>} : vector<10x24xf32>, vector<24x16xf32>, vector<10x16xf32> -> vector<10x16xf32>
    %246 = vector.extract_strided_slice %1 {offsets = [0, 6], sizes = [10, 1], strides = [1, 1]} : vector<80x32xf32> to vector<10x1xf32>
    %247 = vector.broadcast %246 : vector<10x1xf32> to vector<10x16xf32>
    %248 = arith.addf %245, %247 : vector<10x16xf32>
    %249 = tpu.iota {dimensions = array<i32: 0>} : vector<16x16xi32>
    %250 = tpu.iota {dimensions = array<i32: 1>} : vector<16x16xi32>
    %251 = arith.cmpi eq, %249, %250 : vector<16x16xi32>
    %252 = arith.extui %251 : vector<16x16xi1> to vector<16x16xi32>
    %253 = arith.sitofp %252 : vector<16x16xi32> to vector<16x16xf32>
    %cst_70 = arith.constant dense<0.000000e+00> : vector<16x10xf32>
    %254 = tpu.matmul %253, %248, %cst_70 {dimension_numbers = #tpu.dot_dimension_numbers<[1], [1], [0], [0], [0, 0, 1, 0], [], []>} : vector<16x16xf32>, vector<10x16xf32>, vector<16x10xf32> -> vector<16x10xf32>
    %255 = vector.broadcast %106 : vector<16x1xf32> to vector<16x10xf32>
    %256 = arith.mulf %254, %255 : vector<16x10xf32>
    %c0_71 = arith.constant 0 : index
    %c0_72 = arith.constant 0 : index
    %257 = vector.load %arg6[%c0_71, %c0_72] : memref<16x10xf32, #tpu.memory_space<vmem>>, vector<16x10xf32>
    tpu.vector_store %arg6[%c0_71, %c0_72], %256 {strides = array<i32>} : memref<16x10xf32, #tpu.memory_space<vmem>>, vector<16x10xf32>,
    return
  }
}

</mosaic_0001>

<llo_original>
// kernel: gpnn_forward.1
$region0: #{gpnn_forward.1}
  #allocation0 [shape = 'u32[]', space=smem, size = 0x4, offset = 0x4, fixed_abs, tag = 'smem constant byte address 0x4 - core index']
  #allocation1 [shape = 'u32[144,128]{1,0:T(1,128)}', space=vmem, size = 0x12000, scoped, tag = 'internal scratch']
  %s0 = inlined_call_operand.vmem [shape: s32[2], index: 0, kind: input, shape index: {}]
  %s1 = inlined_call_operand.vmem [shape: s32[2], index: 1, kind: input, shape index: {}]
  %s2 = inlined_call_operand.vmem [shape: f32[128,32], index: 2, kind: input, shape index: {}]
  %s3 = inlined_call_operand.vmem [shape: f32[16,24], index: 3, kind: input, shape index: {}]
  %s4 = inlined_call_operand.vmem [shape: bf16[368,32], index: 4, kind: input, shape index: {}]
  %s5 = inlined_call_operand.vmem [shape: f32[1,128], index: 5, kind: output, shape index: {0}]
  %s6 = inlined_call_operand.hbm [shape: f32[16,10], index: 6, kind: output, shape index: {1}]
  %7 = xla_tuple %s5, %s6
  %s8 = sld [smem:[#allocation0]]
  $region46: #{gpnn_forward.1} parent=0
    _
  %s10 = ssub.s32 1, %s8
  %s11 = scalar_select 0, %s10, %s8
  $region1: #{gpnn_forward.1} parent=0
    #allocation2 [shape = 'u8[512]{0}', space=smem, size = 0x200, scoped, tag = 'input window, operand 0, single buffered']
    #allocation3 [shape = 's32[1]{0}', space=sflag, size = 0x4, scoped, tag = 'scoped memory for gpnn_forward.1']
    #allocation4 [shape = 's32[1]{0}', space=sflag, size = 0x4, scoped, tag = 'scoped memory for gpnn_forward.1']
    #allocation5 [shape = 'u8[512]{0}', space=smem, size = 0x200, scoped, tag = 'input window, operand 1, single buffered']
    #allocation6 [shape = 's32[1]{0}', space=sflag, size = 0x4, scoped, tag = 'scoped memory for gpnn_forward.1']
    #allocation7 [shape = 'u8[8192]{0}', space=vmem, size = 0x2000, scoped, tag = 'output window, operand 1, single buffered']
    %12 = vsyncpa [#allocation4], 0
    %13 = vsyncpa [#allocation6], 0
    %14 = vsyncpa [#allocation3], 0
    // Predicated region
    $region2: #{gpnn_forward.1} parent=1 // pred_check
      _
    $region3: #{gpnn_forward.1} parent=1 // pred_check_branch
      %16 = sbr.rel (0) target = $region5
    $region4: #{gpnn_forward.1} parent=1 // pred_region
      %s18 = ssub.s32 16, 16
      %19 = vsyncadd [#allocation4], %s18
      %s21 = sshll.u32 %s0, 4
      %s22 = int_to_ptr.vmem [resolvable:$true] %s21
      %24 = dma.vmem_to_smem %s22, 16, [#allocation2], [#allocation4]
    $region5: #{gpnn_forward.1} parent=1 // pred_fallthru
      _
    // Predicated region
    $region6: #{gpnn_forward.1} parent=1 // pred_check
      _
    $region7: #{gpnn_forward.1} parent=1 // pred_check_branch
      %26 = sbr.rel (0) target = $region9
    $region8: #{gpnn_forward.1} parent=1 // pred_region
      %s28 = ssub.s32 16, 16
      %29 = vsyncadd [#allocation6], %s28
      %s31 = sshll.u32 %s1, 4
      %s32 = int_to_ptr.vmem [resolvable:$true] %s31
      %34 = dma.vmem_to_smem %s32, 16, [#allocation5], [#allocation6]
    $region9: #{gpnn_forward.1} parent=1 // pred_fallthru
      _
    // Predicated region
    $region10: #{gpnn_forward.1} parent=1 // pred_check
      _
    $region11: #{gpnn_forward.1} parent=1 // pred_check_branch
      %36 = sbr.rel (0) target = $region13
    $region12: #{gpnn_forward.1} parent=1 // pred_region
      _
    $region13: #{gpnn_forward.1} parent=1 // pred_fallthru
      _
    // Predicated region
    $region14: #{gpnn_forward.1} parent=1 // pred_check
      _
    $region15: #{gpnn_forward.1} parent=1 // pred_check_branch
      %38 = sbr.rel (0) target = $region17
    $region16: #{gpnn_forward.1} parent=1 // pred_region
      _
    $region17: #{gpnn_forward.1} parent=1 // pred_fallthru
      _
    // Predicated region
    $region18: #{gpnn_forward.1} parent=1 // pred_check
      _
    $region19: #{gpnn_forward.1} parent=1 // pred_check_branch
      %40 = sbr.rel (0) target = $region21
    $region20: #{gpnn_forward.1} parent=1 // pred_region
      _
    $region21: #{gpnn_forward.1} parent=1 // pred_fallthru
      _
    // Predicated region
    $region22: #{gpnn_forward.1} parent=1 // pred_check
      _
    $region23: #{gpnn_forward.1} parent=1 // pred_check_branch
      %42 = sbr.rel (0) target = $region25
    $region24: #{gpnn_forward.1} parent=1 // pred_region
      %43 = dma.done [#allocation4], 16
    $region25: #{gpnn_forward.1} parent=1 // pred_fallthru
      _
    // Predicated region
    $region26: #{gpnn_forward.1} parent=1 // pred_check
      _
    $region27: #{gpnn_forward.1} parent=1 // pred_check_branch
      %45 = sbr.rel (0) target = $region29
    $region28: #{gpnn_forward.1} parent=1 // pred_region
      %46 = dma.done [#allocation6], 16
    $region29: #{gpnn_forward.1} parent=1 // pred_fallthru
      _
    %47 = sfence
    %v48 = vld [vmem:[%s4 + $0x90] sm:$0xf]
    %v49 = vld [vmem:[%s4 + $0x94] sm:$0xf]
    %v50 = vld [vmem:[%s4 + $0x98] sm:$0xf]
    %v51 = vld [vmem:[%s4 + $0x9c] sm:$0xf]
    %v52 = vld [vmem:[%s4 + $0xa0] sm:$0xf]
    %v53 = vld [vmem:[%s4 + $0xa4] sm:$0xf]
    %v54 = vld [vmem:[%s4 + $0xa8] sm:$0xf]
    %v55 = vld [vmem:[%s4 + $0xac] sm:$0xf]
    %v56 = vld [vmem:[%s4 + $0xb0] sm:$0xf]
    %v57 = vunpack.c.l.bf16 %v48
    %v58 = vunpack.c.l.bf16 %v49
    %v59 = vunpack.c.l.bf16 %v50
    %v60 = vunpack.c.l.bf16 %v51
    %v61 = vunpack.c.l.bf16 %v52
    %v62 = vunpack.c.l.bf16 %v53
    %v63 = vunpack.c.l.bf16 %v54
    %v64 = vunpack.c.l.bf16 %v55
    %v65 = vunpack.c.l.bf16 %v56
    %v66 = vlaneseq
    %v67 = vshrl.u32 %v66, 7
    %v68 = vadd.s32 %v67, 8
    %v69 = vadd.s32 %v67, 16
    %v70 = vadd.s32 %v67, 24
    %v71 = vadd.s32 %v67, 32
    %v72 = vadd.s32 %v67, 40
    %v73 = vadd.s32 %v67, 48
    %v74 = vadd.s32 %v67, 56
    %v75 = vadd.s32 %v67, 64
    %v76 = vadd.s32 %v67, 72
    %v77 = vadd.s32 %v67, 80
    %v78 = vadd.s32 %v67, 88
    %v79 = vadd.s32 %v67, 96
    %v80 = vadd.s32 %v67, 104
    %v81 = vadd.s32 %v67, 112
    %v82 = vadd.s32 %v67, 120
    %v83 = vlaneseq
    %v84 = vand.u32 %v83, 127
    %v85 = vshra.s32 %v67, 6
    %v86 = vshra.s32 %v68, 6
    %v87 = vshra.s32 %v69, 6
    %v88 = vshra.s32 %v70, 6
    %v89 = vshra.s32 %v71, 6
    %v90 = vshra.s32 %v72, 6
    %v91 = vshra.s32 %v73, 6
    %v92 = vshra.s32 %v74, 6
    %v93 = vshra.s32 %v75, 6
    %v94 = vshra.s32 %v76, 6
    %v95 = vshra.s32 %v77, 6
    %v96 = vshra.s32 %v78, 6
    %v97 = vshra.s32 %v79, 6
    %v98 = vshra.s32 %v80, 6
    %v99 = vshra.s32 %v81, 6
    %v100 = vshra.s32 %v82, 6
    %v101 = vmul.u32 %v85, 64
    %v102 = vmul.u32 %v86, 64
    %v103 = vmul.u32 %v87, 64
    %v104 = vmul.u32 %v88, 64
    %v105 = vmul.u32 %v89, 64
    %v106 = vmul.u32 %v90, 64
    %v107 = vmul.u32 %v91, 64
    %v108 = vmul.u32 %v92, 64
    %v109 = vmul.u32 %v93, 64
    %v110 = vmul.u32 %v94, 64
    %v111 = vmul.u32 %v95, 64
    %v112 = vmul.u32 %v96, 64
    %v113 = vmul.u32 %v97, 64
    %v114 = vmul.u32 %v98, 64
    %v115 = vmul.u32 %v99, 64
    %v116 = vmul.u32 %v100, 64
    %v117 = vand.u32 %v67, 7
    %v118 = vand.u32 %v68, 7
    %v119 = vand.u32 %v69, 7
    %v120 = vand.u32 %v70, 7
    %v121 = vand.u32 %v71, 7
    %v122 = vand.u32 %v72, 7
    %v123 = vand.u32 %v73, 7
    %v124 = vand.u32 %v74, 7
    %v125 = vand.u32 %v75, 7
    %v126 = vand.u32 %v76, 7
    %v127 = vand.u32 %v77, 7
    %v128 = vand.u32 %v78, 7
    %v129 = vand.u32 %v79, 7
    %v130 = vand.u32 %v80, 7
    %v131 = vand.u32 %v81, 7
    %v132 = vand.u32 %v82, 7
    %v133 = vmul.u32 %v117, 8
    %v134 = vmul.u32 %v118, 8
    %v135 = vmul.u32 %v119, 8
    %v136 = vmul.u32 %v120, 8
    %v137 = vmul.u32 %v121, 8
    %v138 = vmul.u32 %v122, 8
    %v139 = vmul.u32 %v123, 8
    %v140 = vmul.u32 %v124, 8
    %v141 = vmul.u32 %v125, 8
    %v142 = vmul.u32 %v126, 8
    %v143 = vmul.u32 %v127, 8
    %v144 = vmul.u32 %v128, 8
    %v145 = vmul.u32 %v129, 8
    %v146 = vmul.u32 %v130, 8
    %v147 = vmul.u32 %v131, 8
    %v148 = vmul.u32 %v132, 8
    %v149 = vadd.s32 %v101, %v133
    %v150 = vadd.s32 %v102, %v134
    %v151 = vadd.s32 %v103, %v135
    %v152 = vadd.s32 %v104, %v136
    %v153 = vadd.s32 %v105, %v137
    %v154 = vadd.s32 %v106, %v138
    %v155 = vadd.s32 %v107, %v139
    %v156 = vadd.s32 %v108, %v140
    %v157 = vadd.s32 %v109, %v141
    %v158 = vadd.s32 %v110, %v142
    %v159 = vadd.s32 %v111, %v143
    %v160 = vadd.s32 %v112, %v144
    %v161 = vadd.s32 %v113, %v145
    %v162 = vadd.s32 %v114, %v146
    %v163 = vadd.s32 %v115, %v147
    %v164 = vadd.s32 %v116, %v148
    %v165 = vshra.s32 %v67, 3
    %v166 = vshra.s32 %v68, 3
    %v167 = vshra.s32 %v69, 3
    %v168 = vshra.s32 %v70, 3
    %v169 = vshra.s32 %v71, 3
    %v170 = vshra.s32 %v72, 3
    %v171 = vshra.s32 %v73, 3
    %v172 = vshra.s32 %v74, 3
    %v173 = vshra.s32 %v75, 3
    %v174 = vshra.s32 %v76, 3
    %v175 = vshra.s32 %v77, 3
    %v176 = vshra.s32 %v78, 3
    %v177 = vshra.s32 %v79, 3
    %v178 = vshra.s32 %v80, 3
    %v179 = vshra.s32 %v81, 3
    %v180 = vshra.s32 %v82, 3
    %v181 = vand.u32 %v165, 7
    %v182 = vand.u32 %v166, 7
    %v183 = vand.u32 %v167, 7
    %v184 = vand.u32 %v168, 7
    %v185 = vand.u32 %v169, 7
    %v186 = vand.u32 %v170, 7
    %v187 = vand.u32 %v171, 7
    %v188 = vand.u32 %v172, 7
    %v189 = vand.u32 %v173, 7
    %v190 = vand.u32 %v174, 7
    %v191 = vand.u32 %v175, 7
    %v192 = vand.u32 %v176, 7
    %v193 = vand.u32 %v177, 7
    %v194 = vand.u32 %v178, 7
    %v195 = vand.u32 %v179, 7
    %v196 = vand.u32 %v180, 7
    %v197 = vadd.s32 %v149, %v181
    %v198 = vadd.s32 %v150, %v182
    %v199 = vadd.s32 %v151, %v183
    %v200 = vadd.s32 %v152, %v184
    %v201 = vadd.s32 %v153, %v185
    %v202 = vadd.s32 %v154, %v186
    %v203 = vadd.s32 %v155, %v187
    %v204 = vadd.s32 %v156, %v188
    %v205 = vadd.s32 %v157, %v189
    %v206 = vadd.s32 %v158, %v190
    %v207 = vadd.s32 %v159, %v191
    %v208 = vadd.s32 %v160, %v192
    %v209 = vadd.s32 %v161, %v193
    %v210 = vadd.s32 %v162, %v194
    %v211 = vadd.s32 %v163, %v195
    %v212 = vadd.s32 %v164, %v196
    %vm213 = vcmp.eq.s32.totalorder %v84, %v197
    %vm214 = vcmp.eq.s32.totalorder %v84, %v198
    %vm215 = vcmp.eq.s32.totalorder %v84, %v199
    %vm216 = vcmp.eq.s32.totalorder %v84, %v200
    %vm217 = vcmp.eq.s32.totalorder %v84, %v201
    %vm218 = vcmp.eq.s32.totalorder %v84, %v202
    %vm219 = vcmp.eq.s32.totalorder %v84, %v203
    %vm220 = vcmp.eq.s32.totalorder %v84, %v204
    %vm221 = vcmp.eq.s32.totalorder %v84, %v205
    %vm222 = vcmp.eq.s32.totalorder %v84, %v206
    %vm223 = vcmp.eq.s32.totalorder %v84, %v207
    %vm224 = vcmp.eq.s32.totalorder %v84, %v208
    %vm225 = vcmp.eq.s32.totalorder %v84, %v209
    %vm226 = vcmp.eq.s32.totalorder %v84, %v210
    %vm227 = vcmp.eq.s32.totalorder %v84, %v211
    %vm228 = vcmp.eq.s32.totalorder %v84, %v212
    %v229 = vsel %vm213, 1, 0
    %v230 = vsel %vm214, 1, 0
    %v231 = vsel %vm215, 1, 0
    %v232 = vsel %vm216, 1, 0
    %v233 = vsel %vm217, 1, 0
    %v234 = vsel %vm218, 1, 0
    %v235 = vsel %vm219, 1, 0
    %v236 = vsel %vm220, 1, 0
    %v237 = vsel %vm221, 1, 0
    %v238 = vsel %vm222, 1, 0
    %v239 = vsel %vm223, 1, 0
    %v240 = vsel %vm224, 1, 0
    %v241 = vsel %vm225, 1, 0
    %v242 = vsel %vm226, 1, 0
    %v243 = vsel %vm227, 1, 0
    %v244 = vsel %vm228, 1, 0
    %v245 = vcvt.s32.f32 %v229
    %v246 = vcvt.s32.f32 %v230
    %v247 = vcvt.s32.f32 %v231
    %v248 = vcvt.s32.f32 %v232
    %v249 = vcvt.s32.f32 %v233
    %v250 = vcvt.s32.f32 %v234
    %v251 = vcvt.s32.f32 %v235
    %v252 = vcvt.s32.f32 %v236
    %v253 = vcvt.s32.f32 %v237
    %v254 = vcvt.s32.f32 %v238
    %v255 = vcvt.s32.f32 %v239
    %v256 = vcvt.s32.f32 %v240
    %v257 = vcvt.s32.f32 %v241
    %v258 = vcvt.s32.f32 %v242
    %v259 = vcvt.s32.f32 %v243
    %v260 = vcvt.s32.f32 %v244
    %v261 = vmul.u32 %v85, 8
    %v262 = vmul.u32 %v86, 8
    %v263 = vmul.u32 %v87, 8
    %v264 = vmul.u32 %v88, 8
    %v265 = vmul.u32 %v89, 8
    %v266 = vmul.u32 %v90, 8
    %v267 = vmul.u32 %v91, 8
    %v268 = vmul.u32 %v92, 8
    %v269 = vmul.u32 %v93, 8
    %v270 = vmul.u32 %v94, 8
    %v271 = vmul.u32 %v95, 8
    %v272 = vmul.u32 %v96, 8
    %v273 = vmul.u32 %v97, 8
    %v274 = vmul.u32 %v98, 8
    %v275 = vmul.u32 %v99, 8
    %v276 = vmul.u32 %v100, 8
    %v277 = vadd.s32 %v261, %v181
    %v278 = vadd.s32 %v262, %v182
    %v279 = vadd.s32 %v263, %v183
    %v280 = vadd.s32 %v264, %v184
    %v281 = vadd.s32 %v265, %v185
    %v282 = vadd.s32 %v266, %v186
    %v283 = vadd.s32 %v267, %v187
    %v284 = vadd.s32 %v268, %v188
    %v285 = vadd.s32 %v269, %v189
    %v286 = vadd.s32 %v270, %v190
    %v287 = vadd.s32 %v271, %v191
    %v288 = vadd.s32 %v272, %v192
    %v289 = vadd.s32 %v273, %v193
    %v290 = vadd.s32 %v274, %v194
    %v291 = vadd.s32 %v275, %v195
    %v292 = vadd.s32 %v276, %v196
    %vm293 = vcmp.eq.s32.totalorder %v84, %v277
    %vm294 = vcmp.eq.s32.totalorder %v84, %v278
    %vm295 = vcmp.eq.s32.totalorder %v84, %v279
    %vm296 = vcmp.eq.s32.totalorder %v84, %v280
    %vm297 = vcmp.eq.s32.totalorder %v84, %v281
    %vm298 = vcmp.eq.s32.totalorder %v84, %v282
    %vm299 = vcmp.eq.s32.totalorder %v84, %v283
    %vm300 = vcmp.eq.s32.totalorder %v84, %v284
    %vm301 = vcmp.eq.s32.totalorder %v84, %v285
    %vm302 = vcmp.eq.s32.totalorder %v84, %v286
    %vm303 = vcmp.eq.s32.totalorder %v84, %v287
    %vm304 = vcmp.eq.s32.totalorder %v84, %v288
    %vm305 = vcmp.eq.s32.totalorder %v84, %v289
    %vm306 = vcmp.eq.s32.totalorder %v84, %v290
    %vm307 = vcmp.eq.s32.totalorder %v84, %v291
    %vm308 = vcmp.eq.s32.totalorder %v84, %v292
    %v309 = vsel %vm293, 1, 0
    %v310 = vsel %vm294, 1, 0
    %v311 = vsel %vm295, 1, 0
    %v312 = vsel %vm296, 1, 0
    %v313 = vsel %vm297, 1, 0
    %v314 = vsel %vm298, 1, 0
    %v315 = vsel %vm299, 1, 0
    %v316 = vsel %vm300, 1, 0
    %v317 = vsel %vm301, 1, 0
    %v318 = vsel %vm302, 1, 0
    %v319 = vsel %vm303, 1, 0
    %v320 = vsel %vm304, 1, 0
    %v321 = vsel %vm305, 1, 0
    %v322 = vsel %vm306, 1, 0
    %v323 = vsel %vm307, 1, 0
    %v324 = vsel %vm308, 1, 0
    %v325 = vcvt.s32.f32 %v309
    %v326 = vcvt.s32.f32 %v310
    %v327 = vcvt.s32.f32 %v311
    %v328 = vcvt.s32.f32 %v312
    %v329 = vcvt.s32.f32 %v313
    %v330 = vcvt.s32.f32 %v314
    %v331 = vcvt.s32.f32 %v315
    %v332 = vcvt.s32.f32 %v316
    %v333 = vcvt.s32.f32 %v317
    %v334 = vcvt.s32.f32 %v318
    %v335 = vcvt.s32.f32 %v319
    %v336 = vcvt.s32.f32 %v320
    %v337 = vcvt.s32.f32 %v321
    %v338 = vcvt.s32.f32 %v322
    %v339 = vcvt.s32.f32 %v323
    %v340 = vcvt.s32.f32 %v324
    %v341 = vshra.s32 %v84, 6
    %v342 = vmul.u32 %v341, 8
    %v343 = vand.u32 %v84, 7
    %v344 = vadd.s32 %v342, %v343
    %vm345 = vcmp.eq.s32.totalorder %v67, %v344
    %vm346 = vcmp.eq.s32.totalorder %v68, %v344
    %v347 = vsel %vm345, 1, 0
    %v348 = vsel %vm346, 1, 0
    %v349 = vcvt.s32.f32 %v347
    %v350 = vcvt.s32.f32 %v348
    %v351 = vshra.s32 %v84, 3
    %v352 = vand.u32 %v351, 7
    %s353 = sld [smem:[#allocation2]]
    %s354 = sld [smem:[#allocation5]]
    %s355 = sadd.s32 %s353, %s354
    %vm356 = vcmp.eq.s32.totalorder %v341, 0
    %v357 = vstv %s355
    %vm358 = vcmp.lt.s32.totalorder %v352, %v357
    %vm359 = vmand %vm356, %vm358
    %vm360 = vcmp.lt.s32.totalorder %v343, %v357
    %vm361 = vmand %vm359, %vm360
    %v362 = vsel %vm361, 1, 0
    %v363 = vcvt.s32.f32 %v362
    %v364 = vadd.f32 %v363, 0.0
    %vm365 = vcmp.eq.s32.totalorder %v165, 0
    %vm366 = vcmp.eq.s32.totalorder %v166, 0
    %vm367 = vcmp.lt.s32.totalorder %v117, %v357
    %vm368 = vcmp.lt.s32.totalorder %v118, %v357
    %vm369 = vmand %vm365, %vm367
    %vm370 = vmand %vm366, %vm368
    %v371 = vsel %vm369, 1, 0
    %v372 = vsel %vm370, 1, 0
    %v373 = vcvt.s32.f32 %v371
    %v374 = vcvt.s32.f32 %v372
    %v375 = vadd.f32 %v373, 0.0
    %v376 = vadd.f32 %v374, 0.0
    %s377 = sld [smem:[#allocation2 + $0x1]]
    %s378 = sld [smem:[#allocation5 + $0x1]]
    %s379 = sadd.s32 %s377, %s378
    %vm380 = vcmp.eq.s32.totalorder %v341, 1
    %v381 = vstv %s379
    %vm382 = vcmp.lt.s32.totalorder %v352, %v381
    %vm383 = vmand %vm380, %vm382
    %vm384 = vcmp.lt.s32.totalorder %v343, %v381
    %vm385 = vmand %vm383, %vm384
    %v386 = vsel %vm385, 1, 0
    %v387 = vcvt.s32.f32 %v386
    %v388 = vadd.f32 %v364, %v387
    %vm389 = vcmp.eq.s32.totalorder %v165, 1
    %vm390 = vcmp.eq.s32.totalorder %v166, 1
    %vm391 = vcmp.lt.s32.totalorder %v117, %v381
    %vm392 = vcmp.lt.s32.totalorder %v118, %v381
    %vm393 = vmand %vm389, %vm391
    %vm394 = vmand %vm390, %vm392
    %v395 = vsel %vm393, 1, 0
    %v396 = vsel %vm394, 1, 0
    %v397 = vcvt.s32.f32 %v395
    %v398 = vcvt.s32.f32 %v396
    %v399 = vadd.f32 %v375, %v397
    %v400 = vadd.f32 %v376, %v398
    %vm401 = vcmp.eq.s32.totalorder %v67, %v84
    %vm402 = vcmp.eq.s32.totalorder %v68, %v84
    %vm403 = vcmp.eq.s32.totalorder %v69, %v84
    %vm404 = vcmp.eq.s32.totalorder %v70, %v84
    %v405 = vsel %vm401, 1, 0
    %v406 = vsel %vm402, 1, 0
    %v407 = vsel %vm403, 1, 0
    %v408 = vsel %vm404, 1, 0
    %v409 = vcvt.s32.f32 %v405
    %v410 = vcvt.s32.f32 %v406
    %v411 = vcvt.s32.f32 %v407
    %v412 = vcvt.s32.f32 %v408
    %v413 = vld [vmem:[%s2] sm:$0xff]
    %v414 = vld [vmem:[%s2 + $0x8] sm:$0xff]
    %v415 = vld [vmem:[%s2 + $0x10] sm:$0xff]
    %v416 = vld [vmem:[%s2 + $0x18] sm:$0xff]
    %v417 = vld [vmem:[%s2 + $0x20] sm:$0xff]
    %v418 = vld [vmem:[%s2 + $0x28] sm:$0xff]
    %v419 = vld [vmem:[%s2 + $0x30] sm:$0xff]
    %v420 = vld [vmem:[%s2 + $0x38] sm:$0xff]
    %v421 = vld [vmem:[%s2 + $0x40] sm:$0xff]
    %v422 = vld [vmem:[%s2 + $0x48] sm:$0xff]
    %v423 = vld [vmem:[%s2 + $0x50] sm:$0xff]
    %v424 = vld [vmem:[%s2 + $0x58] sm:$0xff]
    %v425 = vld [vmem:[%s2 + $0x60] sm:$0xff]
    %v426 = vld [vmem:[%s2 + $0x68] sm:$0xff]
    %v427 = vld [vmem:[%s2 + $0x70] sm:$0xff]
    %v428 = vld [vmem:[%s2 + $0x78] sm:$0xff]
    %vm429 = vcmask 261120
    %v431 = vsel %vm429, %v409, 0
    %v434 = vsel %vm429, %v410, 0
    %v437 = vsel %vm429, %v411, 0
    %v440 = vsel %vm429, %v412, 0
    %v443 = vsel %vm429, %v413, 0
    %v446 = vsel %vm429, %v414, 0
    %v449 = vsel %vm429, %v415, 0
    %v452 = vsel %vm429, %v416, 0
    %v455 = vsel %vm429, %v417, 0
    %v458 = vsel %vm429, %v418, 0
    %v461 = vsel %vm429, %v419, 0
    %v464 = vsel %vm429, %v420, 0
    %v467 = vsel %vm429, %v421, 0
    %v470 = vsel %vm429, %v422, 0
    %v473 = vsel %vm429, %v423, 0
    %v476 = vsel %vm429, %v424, 0
    %v479 = vsel %vm429, %v425, 0
    %v482 = vsel %vm429, %v426, 0
    %v485 = vsel %vm429, %v427, 0
    %v488 = vsel %vm429, %v428, 0
    %490 = vmatprep.subr.mxu0 0.0
    %491 = vmatpush1.xpose.msra.mxu0 %v443
    %492 = vmatprep.subr.mxu0 0.0
    %493 = vmatpush1.xpose.msra.mxu0 %v446
    %494 = vmatprep.subr.mxu0 0.0
    %495 = vmatpush1.xpose.msra.mxu0 %v449
    %496 = vmatprep.subr.mxu0 0.0
    %497 = vmatpush1.xpose.msra.mxu0 %v452
    %498 = vmatprep.subr.mxu0 0.0
    %499 = vmatpush1.xpose.msra.mxu0 %v455
    %500 = vmatprep.subr.mxu0 0.0
    %501 = vmatpush1.xpose.msra.mxu0 %v458
    %502 = vmatprep.subr.mxu0 0.0
    %503 = vmatpush1.xpose.msra.mxu0 %v461
    %504 = vmatprep.subr.mxu0 0.0
    %505 = vmatpush1.xpose.msra.mxu0 %v464
    %506 = vmatprep.subr.mxu0 0.0
    %507 = vmatpush1.xpose.msra.mxu0 %v467
    %508 = vmatprep.subr.mxu0 0.0
    %509 = vmatpush1.xpose.msra.mxu0 %v470
    %510 = vmatprep.subr.mxu0 0.0
    %511 = vmatpush1.xpose.msra.mxu0 %v473
    %512 = vmatprep.subr.mxu0 0.0
    %513 = vmatpush1.xpose.msra.mxu0 %v476
    %514 = vmatprep.subr.mxu0 0.0
    %515 = vmatpush1.xpose.msra.mxu0 %v479
    %516 = vmatprep.subr.mxu0 0.0
    %517 = vmatpush1.xpose.msra.mxu0 %v482
    %518 = vmatprep.subr.mxu0 0.0
    %519 = vmatpush1.xpose.msra.mxu0 %v485
    %520 = vmatprep.subr.mxu0 0.0
    %521 = vmatpush1.xpose.msra.mxu0 %v488
    %522 = vmatprep.subr.mxu0 0.0
    %523 = vmatpush1.xpose.msra.mxu0 0.0
    %524 = vmatprep.subr.mxu0 0.0
    %525 = vmatpush1.xpose.msra.mxu0 0.0
    %526 = vmatprep.subr.mxu0 0.0
    %527 = vmatpush1.xpose.msra.mxu0 0.0
    %528 = vmatprep.subr.mxu0 0.0
    %529 = vmatpush1.xpose.msra.mxu0 0.0
    %530 = vmatprep.subr.mxu0 0.0
    %531 = vmatpush1.xpose.msra.mxu0 0.0
    %532 = vmatprep.subr.mxu0 0.0
    %533 = vmatpush1.xpose.msra.mxu0 0.0
    %534 = vmatprep.subr.mxu0 0.0
    %535 = vmatpush1.xpose.msra.mxu0 0.0
    %536 = vmatprep.subr.mxu0 0.0
    %537 = vmatpush1.xpose.msra.mxu0 0.0
    %538 = vmatprep.subr.mxu0 0.0
    %539 = vmatpush1.xpose.msra.mxu0 0.0
    %540 = vmatprep.subr.mxu0 0.0
    %541 = vmatpush1.xpose.msra.mxu0 0.0
    %542 = vmatprep.subr.mxu0 0.0
    %543 = vmatpush1.xpose.msra.mxu0 0.0
    %544 = vmatprep.subr.mxu0 0.0
    %545 = vmatpush1.xpose.msra.mxu0 0.0
    %546 = vmatprep.subr.mxu0 0.0
    %547 = vmatpush1.xpose.msra.mxu0 0.0
    %548 = vmatprep.subr.mxu0 0.0
    %549 = vmatpush1.xpose.msra.mxu0 0.0
    %550 = vmatprep.subr.mxu0 0.0
    %551 = vmatpush1.xpose.msra.mxu0 0.0
    %552 = vmatprep.subr.mxu0 0.0
    %553 = vmatpush1.xpose.msra.mxu0 0.0
    %554 = vmatprep.mubr.f32.mxu0 0.0
    %555 = vmatmul.mubr.f32.gmra.mrb[0].mxu0 %v431
    %v556 = vpop.f32.mrb[0].mxu0
    %v557 = vadd.f32 0.0, %v556
    %v558 = vpop.f32.mrb[0].mxu0
    %559 = vmatprep.mubr.f32.mxu0 0.0
    %560 = vmatmul.mubr.f32.gmra.mrb[0].mxu0 %v434
    %v561 = vpop.f32.mrb[0].mxu0
    %v562 = vadd.f32 0.0, %v561
    %v563 = vpop.f32.mrb[0].mxu0
    %564 = vmatprep.mubr.f32.mxu0 0.0
    %565 = vmatmul.mubr.f32.gmra.mrb[0].mxu0 %v437
    %v566 = vpop.f32.mrb[0].mxu0
    %v567 = vadd.f32 0.0, %v566
    %v568 = vpop.f32.mrb[0].mxu0
    %569 = vmatprep.mubr.f32.mxu0 0.0
    %570 = vmatmul.mubr.f32.gmra.mrb[0].mxu0 %v440
    %v571 = vpop.f32.mrb[0].mxu0
    %v572 = vadd.f32 0.0, %v571
    %v573 = vpop.f32.mrb[0].mxu0
    %574 = vdwg.mxu0
    %v575 = vld [vmem:[%s3] sm:$0xff]
    %v576 = vld [vmem:[%s3 + $0x8] sm:$0xff]
    %vm577 = vcmask 195584
    %v578 = vsel %vm577, %v409, 0
    %v580 = vsel %vm577, %v410, 0
    %v582 = vsel %vm577, %v411, 0
    %v585 = vsel %vm577, %v575, 0
    %v588 = vsel %vm577, %v576, 0
    %590 = vmatprep.subr.mxu0 0.0
    %591 = vmatpush1.xpose.msra.mxu0 %v585
    %592 = vmatprep.subr.mxu0 0.0
    %593 = vmatpush1.xpose.msra.mxu0 %v588
    %594 = vmatprep.subr.mxu0 0.0
    %595 = vmatpush1.xpose.msra.mxu0 0.0
    %596 = vmatprep.subr.mxu0 0.0
    %597 = vmatpush1.xpose.msra.mxu0 0.0
    %598 = vmatprep.subr.mxu0 0.0
    %599 = vmatpush1.xpose.msra.mxu0 0.0
    %600 = vmatprep.subr.mxu0 0.0
    %601 = vmatpush1.xpose.msra.mxu0 0.0
    %602 = vmatprep.subr.mxu0 0.0
    %603 = vmatpush1.xpose.msra.mxu0 0.0
    %604 = vmatprep.subr.mxu0 0.0
    %605 = vmatpush1.xpose.msra.mxu0 0.0
    %606 = vmatprep.subr.mxu0 0.0
    %607 = vmatpush1.xpose.msra.mxu0 0.0
    %608 = vmatprep.subr.mxu0 0.0
    %609 = vmatpush1.xpose.msra.mxu0 0.0
    %610 = vmatprep.subr.mxu0 0.0
    %611 = vmatpush1.xpose.msra.mxu0 0.0
    %612 = vmatprep.subr.mxu0 0.0
    %613 = vmatpush1.xpose.msra.mxu0 0.0
    %614 = vmatprep.subr.mxu0 0.0
    %615 = vmatpush1.xpose.msra.mxu0 0.0
    %616 = vmatprep.subr.mxu0 0.0
    %617 = vmatpush1.xpose.msra.mxu0 0.0
    %618 = vmatprep.subr.mxu0 0.0
    %619 = vmatpush1.xpose.msra.mxu0 0.0
    %620 = vmatprep.subr.mxu0 0.0
    %621 = vmatpush1.xpose.msra.mxu0 0.0
    %622 = vmatprep.subr.mxu0 0.0
    %623 = vmatpush1.xpose.msra.mxu0 0.0
    %624 = vmatprep.subr.mxu0 0.0
    %625 = vmatpush1.xpose.msra.mxu0 0.0
    %626 = vmatprep.subr.mxu0 0.0
    %627 = vmatpush1.xpose.msra.mxu0 0.0
    %628 = vmatprep.subr.mxu0 0.0
    %629 = vmatpush1.xpose.msra.mxu0 0.0
    %630 = vmatprep.subr.mxu0 0.0
    %631 = vmatpush1.xpose.msra.mxu0 0.0
    %632 = vmatprep.subr.mxu0 0.0
    %633 = vmatpush1.xpose.msra.mxu0 0.0
    %634 = vmatprep.subr.mxu0 0.0
    %635 = vmatpush1.xpose.msra.mxu0 0.0
    %636 = vmatprep.subr.mxu0 0.0
    %637 = vmatpush1.xpose.msra.mxu0 0.0
    %638 = vmatprep.subr.mxu0 0.0
    %639 = vmatpush1.xpose.msra.mxu0 0.0
    %640 = vmatprep.subr.mxu0 0.0
    %641 = vmatpush1.xpose.msra.mxu0 0.0
    %642 = vmatprep.subr.mxu0 0.0
    %643 = vmatpush1.xpose.msra.mxu0 0.0
    %644 = vmatprep.subr.mxu0 0.0
    %645 = vmatpush1.xpose.msra.mxu0 0.0
    %646 = vmatprep.subr.mxu0 0.0
    %647 = vmatpush1.xpose.msra.mxu0 0.0
    %648 = vmatprep.subr.mxu0 0.0
    %649 = vmatpush1.xpose.msra.mxu0 0.0
    %650 = vmatprep.subr.mxu0 0.0
    %651 = vmatpush1.xpose.msra.mxu0 0.0
    %652 = vmatprep.subr.mxu0 0.0
    %653 = vmatpush1.xpose.msra.mxu0 0.0
    %654 = vmatprep.mubr.f32.mxu0 0.0
    %655 = vmatmul.mubr.f32.gmra.mrb[0].mxu0 %v578
    %v656 = vpop.f32.mrb[0].mxu0
    %v657 = vadd.f32 0.0, %v656
    %v658 = vpop.f32.mrb[0].mxu0
    %659 = vmatprep.mubr.f32.mxu0 0.0
    %660 = vmatmul.mubr.f32.gmra.mrb[0].mxu0 %v580
    %v661 = vpop.f32.mrb[0].mxu0
    %v662 = vadd.f32 0.0, %v661
    %v663 = vpop.f32.mrb[0].mxu0
    %664 = vmatprep.mubr.f32.mxu0 0.0
    %665 = vmatmul.mubr.f32.gmra.mrb[0].mxu0 %v582
    %v666 = vpop.f32.mrb[0].mxu0
    %v667 = vadd.f32 0.0, %v666
    %v668 = vpop.f32.mrb[0].mxu0
    %669 = vdwg.mxu0
    %v670 = vld [vmem:[%s4] sm:$0xf]
    %v671 = vld [vmem:[%s4 + $0x4] sm:$0xf]
    %v672 = vunpack.c.l.bf16 %v670
    %v673 = vunpack.c.l.bf16 %v671
    %v674 = vld [vmem:[%s4 + $0x8] sm:$0xf]
    %v675 = vld [vmem:[%s4 + $0xc] sm:$0xf]
    %v676 = vunpack.c.l.bf16 %v674
    %v677 = vunpack.c.l.bf16 %v675
    %v678 = vld [vmem:[%s4 + $0x10] sm:$0xf]
    %v679 = vunpack.c.l.bf16 %v678
    %681 = vset.pattern.permute.xlu0 3
    %682 = vperm.xlu0 %681, %v57
    %v683 = vpop.permute.xlu0 %682
    %686 = vset.pattern.permute.xlu0 3
    %687 = vperm.xlu0 %686, %v58
    %v688 = vpop.permute.xlu0 %687
    %690 = vset.pattern.permute.xlu0 4
    %691 = vperm.xlu0 %690, %v57
    %v692 = vpop.permute.xlu0 %691
    %694 = vset.pattern.permute.xlu0 4
    %695 = vperm.xlu0 %694, %v58
    %v696 = vpop.permute.xlu0 %695
    %698 = vset.pattern.permute.xlu0 5
    %699 = vperm.xlu0 %698, %v57
    %v700 = vpop.permute.xlu0 %699
    %v702 = vld [vmem:[%s4 + $0x18] sm:$0xf]
    %v703 = vld [vmem:[%s4 + $0x1c] sm:$0xf]
    %v704 = vld [vmem:[%s4 + $0x20] sm:$0xf]
    %v705 = vld [vmem:[%s4 + $0x24] sm:$0xf]
    %v706 = vunpack.c.l.bf16 %v702
    %v707 = vunpack.c.l.bf16 %v703
    %v708 = vunpack.c.l.bf16 %v704
    %v709 = vunpack.c.l.bf16 %v705
    %v711 = vsel %vm577, %v706, 0
    %v714 = vsel %vm577, %v707, 0
    %v717 = vsel %vm577, %v708, 0
    %v720 = vsel %vm577, %v709, 0
    %722 = vmatprep.subr.mxu0 0.0
    %723 = vmatpush1.msra.mxu0 %v657
    %724 = vmatprep.subr.mxu0 0.0
    %725 = vmatpush1.msra.mxu0 %v662
    %726 = vmatprep.subr.mxu0 0.0
    %727 = vmatpush1.msra.mxu0 %v667
    %728 = vmatprep.subr.mxu0 0.0
    %729 = vmatpush1.msra.mxu0 0.0
    %730 = vmatprep.subr.mxu0 0.0
    %731 = vmatpush1.msra.mxu0 0.0
    %732 = vmatprep.subr.mxu0 0.0
    %733 = vmatpush1.msra.mxu0 0.0
    %734 = vmatprep.subr.mxu0 0.0
    %735 = vmatpush1.msra.mxu0 0.0
    %736 = vmatprep.subr.mxu0 0.0
    %737 = vmatpush1.msra.mxu0 0.0
    %738 = vmatprep.subr.mxu0 0.0
    %739 = vmatpush1.msra.mxu0 0.0
    %740 = vmatprep.subr.mxu0 0.0
    %741 = vmatpush1.msra.mxu0 0.0
    %742 = vmatprep.subr.mxu0 0.0
    %743 = vmatpush1.msra.mxu0 0.0
    %744 = vmatprep.subr.mxu0 0.0
    %745 = vmatpush1.msra.mxu0 0.0
    %746 = vmatprep.subr.mxu0 0.0
    %747 = vmatpush1.msra.mxu0 0.0
    %748 = vmatprep.subr.mxu0 0.0
    %749 = vmatpush1.msra.mxu0 0.0
    %750 = vmatprep.subr.mxu0 0.0
    %751 = vmatpush1.msra.mxu0 0.0
    %752 = vmatprep.subr.mxu0 0.0
    %753 = vmatpush1.msra.mxu0 0.0
    %754 = vmatprep.subr.mxu0 0.0
    %755 = vmatpush1.msra.mxu0 0.0
    %756 = vmatprep.subr.mxu0 0.0
    %757 = vmatpush1.msra.mxu0 0.0
    %758 = vmatprep.subr.mxu0 0.0
    %759 = vmatpush1.msra.mxu0 0.0
    %760 = vmatprep.subr.mxu0 0.0
    %761 = vmatpush1.msra.mxu0 0.0
    %762 = vmatprep.subr.mxu0 0.0
    %763 = vmatpush1.msra.mxu0 0.0
    %764 = vmatprep.subr.mxu0 0.0
    %765 = vmatpush1.msra.mxu0 0.0
    %766 = vmatprep.subr.mxu0 0.0
    %767 = vmatpush1.msra.mxu0 0.0
    %768 = vmatprep.subr.mxu0 0.0
    %769 = vmatpush1.msra.mxu0 0.0
    %770 = vmatprep.subr.mxu0 0.0
    %771 = vmatpush1.msra.mxu0 0.0
    %772 = vmatprep.subr.mxu0 0.0
    %773 = vmatpush1.msra.mxu0 0.0
    %774 = vmatprep.subr.mxu0 0.0
    %775 = vmatpush1.msra.mxu0 0.0
    %776 = vmatprep.subr.mxu0 0.0
    %777 = vmatpush1.msra.mxu0 0.0
    %778 = vmatprep.subr.mxu0 0.0
    %779 = vmatpush1.msra.mxu0 0.0
    %780 = vmatprep.subr.mxu0 0.0
    %781 = vmatpush1.msra.mxu0 0.0
    %782 = vmatprep.subr.mxu0 0.0
    %783 = vmatpush1.msra.mxu0 0.0
    %784 = vmatprep.subr.mxu0 0.0
    %785 = vmatpush1.msra.mxu0 0.0
    %786 = vmatprep.mubr.f32.mxu0 0.0
    %787 = vmatmul.mubr.f32.gmra.mrb[0].mxu0 %v711
    %v788 = vpop.f32.mrb[0].mxu0
    %v789 = vadd.f32 0.0, %v788
    %v790 = vpop.f32.mrb[0].mxu0
    %791 = vmatprep.mubr.f32.mxu0 0.0
    %792 = vmatmul.mubr.f32.gmra.mrb[0].mxu0 %v714
    %v793 = vpop.f32.mrb[0].mxu0
    %v794 = vadd.f32 0.0, %v793
    %v795 = vpop.f32.mrb[0].mxu0
    %796 = vmatprep.mubr.f32.mxu0 0.0
    %797 = vmatmul.mubr.f32.gmra.mrb[0].mxu0 %v717
    %v798 = vpop.f32.mrb[0].mxu0
    %v799 = vadd.f32 0.0, %v798
    %v800 = vpop.f32.mrb[0].mxu0
    %801 = vmatprep.mubr.f32.mxu0 0.0
    %802 = vmatmul.mubr.f32.gmra.mrb[0].mxu0 %v720
    %v803 = vpop.f32.mrb[0].mxu0
    %v804 = vadd.f32 0.0, %v803
    %v805 = vpop.f32.mrb[0].mxu0
    %806 = vdwg.mxu0
    %v807 = vld [vmem:[%s4 + $0x28] sm:$0xf]
    %v808 = vld [vmem:[%s4 + $0x2c] sm:$0xf]
    %v809 = vld [vmem:[%s4 + $0x30] sm:$0xf]
    %v810 = vld [vmem:[%s4 + $0x34] sm:$0xf]
    %v811 = vunpack.c.l.bf16 %v807
    %v812 = vunpack.c.l.bf16 %v808
    %v813 = vunpack.c.l.bf16 %v809
    %v814 = vunpack.c.l.bf16 %v810
    %v816 = vsel %vm429, %v811, 0
    %v819 = vsel %vm429, %v812, 0
    %v822 = vsel %vm429, %v813, 0
    %v825 = vsel %vm429, %v814, 0
    %827 = vmatprep.subr.mxu0 0.0
    %828 = vmatpush1.msra.mxu0 %v557
    %829 = vmatprep.subr.mxu0 0.0
    %830 = vmatpush1.msra.mxu0 %v562
    %831 = vmatprep.subr.mxu0 0.0
    %832 = vmatpush1.msra.mxu0 %v567
    %833 = vmatprep.subr.mxu0 0.0
    %834 = vmatpush1.msra.mxu0 %v572
    %835 = vmatprep.subr.mxu0 0.0
    %836 = vmatpush1.msra.mxu0 0.0
    %837 = vmatprep.subr.mxu0 0.0
    %838 = vmatpush1.msra.mxu0 0.0
    %839 = vmatprep.subr.mxu0 0.0
    %840 = vmatpush1.msra.mxu0 0.0
    %841 = vmatprep.subr.mxu0 0.0
    %842 = vmatpush1.msra.mxu0 0.0
    %843 = vmatprep.subr.mxu0 0.0
    %844 = vmatpush1.msra.mxu0 0.0
    %845 = vmatprep.subr.mxu0 0.0
    %846 = vmatpush1.msra.mxu0 0.0
    %847 = vmatprep.subr.mxu0 0.0
    %848 = vmatpush1.msra.mxu0 0.0
    %849 = vmatprep.subr.mxu0 0.0
    %850 = vmatpush1.msra.mxu0 0.0
    %851 = vmatprep.subr.mxu0 0.0
    %852 = vmatpush1.msra.mxu0 0.0
    %853 = vmatprep.subr.mxu0 0.0
    %854 = vmatpush1.msra.mxu0 0.0
    %855 = vmatprep.subr.mxu0 0.0
    %856 = vmatpush1.msra.mxu0 0.0
    %857 = vmatprep.subr.mxu0 0.0
    %858 = vmatpush1.msra.mxu0 0.0
    %859 = vmatprep.subr.mxu0 0.0
    %860 = vmatpush1.msra.mxu0 0.0
    %861 = vmatprep.subr.mxu0 0.0
    %862 = vmatpush1.msra.mxu0 0.0
    %863 = vmatprep.subr.mxu0 0.0
    %864 = vmatpush1.msra.mxu0 0.0
    %865 = vmatprep.subr.mxu0 0.0
    %866 = vmatpush1.msra.mxu0 0.0
    %867 = vmatprep.subr.mxu0 0.0
    %868 = vmatpush1.msra.mxu0 0.0
    %869 = vmatprep.subr.mxu0 0.0
    %870 = vmatpush1.msra.mxu0 0.0
    %871 = vmatprep.subr.mxu0 0.0
    %872 = vmatpush1.msra.mxu0 0.0
    %873 = vmatprep.subr.mxu0 0.0
    %874 = vmatpush1.msra.mxu0 0.0
    %875 = vmatprep.subr.mxu0 0.0
    %876 = vmatpush1.msra.mxu0 0.0
    %877 = vmatprep.subr.mxu0 0.0
    %878 = vmatpush1.msra.mxu0 0.0
    %879 = vmatprep.subr.mxu0 0.0
    %880 = vmatpush1.msra.mxu0 0.0
    %881 = vmatprep.subr.mxu0 0.0
    %882 = vmatpush1.msra.mxu0 0.0
    %883 = vmatprep.subr.mxu0 0.0
    %884 = vmatpush1.msra.mxu0 0.0
    %885 = vmatprep.subr.mxu0 0.0
    %886 = vmatpush1.msra.mxu0 0.0
    %887 = vmatprep.subr.mxu0 0.0
    %888 = vmatpush1.msra.mxu0 0.0
    %889 = vmatprep.subr.mxu0 0.0
    %890 = vmatpush1.msra.mxu0 0.0
    %891 = vmatprep.mubr.f32.mxu0 0.0
    %892 = vmatmul.mubr.f32.gmra.mrb[0].mxu0 %v816
    %v893 = vpop.f32.mrb[0].mxu0
    %v894 = vadd.f32 0.0, %v893
    %v895 = vpop.f32.mrb[0].mxu0
    %896 = vmatprep.mubr.f32.mxu0 0.0
    %897 = vmatmul.mubr.f32.gmra.mrb[0].mxu0 %v819
    %v898 = vpop.f32.mrb[0].mxu0
    %v899 = vadd.f32 0.0, %v898
    %v900 = vpop.f32.mrb[0].mxu0
    %901 = vmatprep.mubr.f32.mxu0 0.0
    %902 = vmatmul.mubr.f32.gmra.mrb[0].mxu0 %v822
    %v903 = vpop.f32.mrb[0].mxu0
    %v904 = vadd.f32 0.0, %v903
    %v905 = vpop.f32.mrb[0].mxu0
    %906 = vmatprep.mubr.f32.mxu0 0.0
    %907 = vmatmul.mubr.f32.gmra.mrb[0].mxu0 %v825
    %v908 = vpop.f32.mrb[0].mxu0
    %v909 = vadd.f32 0.0, %v908
    %v910 = vpop.f32.mrb[0].mxu0
    %911 = vdwg.mxu0
    %vm912 = vcmask 130048
    %v914 = vsel %vm912, %v789, 0
    %v917 = vsel %vm912, %v794, 0
    %v920 = vsel %vm912, %v799, 0
    %v923 = vsel %vm912, %v804, 0
    %925 = vmatprep.subr.mxu0 0.0
    %926 = vmatpush1.msra.mxu0 %v349
    %927 = vmatprep.subr.mxu0 0.0
    %928 = vmatpush1.msra.mxu0 %v350
    %929 = vmatprep.subr.mxu0 0.0
    %930 = vmatpush1.msra.mxu0 0.0
    %931 = vmatprep.subr.mxu0 0.0
    %932 = vmatpush1.msra.mxu0 0.0
    %933 = vmatprep.subr.mxu0 0.0
    %934 = vmatpush1.msra.mxu0 0.0
    %935 = vmatprep.subr.mxu0 0.0
    %936 = vmatpush1.msra.mxu0 0.0
    %937 = vmatprep.subr.mxu0 0.0
    %938 = vmatpush1.msra.mxu0 0.0
    %939 = vmatprep.subr.mxu0 0.0
    %940 = vmatpush1.msra.mxu0 0.0
    %941 = vmatprep.subr.mxu0 0.0
    %942 = vmatpush1.msra.mxu0 0.0
    %943 = vmatprep.subr.mxu0 0.0
    %944 = vmatpush1.msra.mxu0 0.0
    %945 = vmatprep.subr.mxu0 0.0
    %946 = vmatpush1.msra.mxu0 0.0
    %947 = vmatprep.subr.mxu0 0.0
    %948 = vmatpush1.msra.mxu0 0.0
    %949 = vmatprep.subr.mxu0 0.0
    %950 = vmatpush1.msra.mxu0 0.0
    %951 = vmatprep.subr.mxu0 0.0
    %952 = vmatpush1.msra.mxu0 0.0
    %953 = vmatprep.subr.mxu0 0.0
    %954 = vmatpush1.msra.mxu0 0.0
    %955 = vmatprep.subr.mxu0 0.0
    %956 = vmatpush1.msra.mxu0 0.0
    %957 = vmatprep.subr.mxu0 0.0
    %958 = vmatpush1.msra.mxu0 0.0
    %959 = vmatprep.subr.mxu0 0.0
    %960 = vmatpush1.msra.mxu0 0.0
    %961 = vmatprep.subr.mxu0 0.0
    %962 = vmatpush1.msra.mxu0 0.0
    %963 = vmatprep.subr.mxu0 0.0
    %964 = vmatpush1.msra.mxu0 0.0
    %965 = vmatprep.subr.mxu0 0.0
    %966 = vmatpush1.msra.mxu0 0.0
    %967 = vmatprep.subr.mxu0 0.0
    %968 = vmatpush1.msra.mxu0 0.0
    %969 = vmatprep.subr.mxu0 0.0
    %970 = vmatpush1.msra.mxu0 0.0
    %971 = vmatprep.subr.mxu0 0.0
    %972 = vmatpush1.msra.mxu0 0.0
    %973 = vmatprep.subr.mxu0 0.0
    %974 = vmatpush1.msra.mxu0 0.0
    %975 = vmatprep.subr.mxu0 0.0
    %976 = vmatpush1.msra.mxu0 0.0
    %977 = vmatprep.subr.mxu0 0.0
    %978 = vmatpush1.msra.mxu0 0.0
    %979 = vmatprep.subr.mxu0 0.0
    %980 = vmatpush1.msra.mxu0 0.0
    %981 = vmatprep.subr.mxu0 0.0
    %982 = vmatpush1.msra.mxu0 0.0
    %983 = vmatprep.subr.mxu0 0.0
    %984 = vmatpush1.msra.mxu0 0.0
    %985 = vmatprep.subr.mxu0 0.0
    %986 = vmatpush1.msra.mxu0 0.0
    %987 = vmatprep.subr.mxu0 0.0
    %988 = vmatpush1.msra.mxu0 0.0
    %989 = vmatprep.mubr.f32.mxu0 0.0
    %990 = vmatmul.mubr.f32.gmra.mrb[0].mxu0 %v914
    %v991 = vpop.f32.mrb[0].mxu0
    %v992 = vadd.f32 %v894, %v991
    %v993 = vpop.f32.mrb[0].mxu0
    %994 = vmatprep.mubr.f32.mxu0 0.0
    %995 = vmatmul.mubr.f32.gmra.mrb[0].mxu0 %v917
    %v996 = vpop.f32.mrb[0].mxu0
    %v997 = vadd.f32 %v899, %v996
    %v998 = vpop.f32.mrb[0].mxu0
    %999 = vmatprep.mubr.f32.mxu0 0.0
    %1000 = vmatmul.mubr.f32.gmra.mrb[0].mxu0 %v920
    %v1001 = vpop.f32.mrb[0].mxu0
    %v1002 = vadd.f32 %v904, %v1001
    %v1003 = vpop.f32.mrb[0].mxu0
    %1004 = vmatprep.mubr.f32.mxu0 0.0
    %1005 = vmatmul.mubr.f32.gmra.mrb[0].mxu0 %v923
    %v1006 = vpop.f32.mrb[0].mxu0
    %v1007 = vadd.f32 %v909, %v1006
    %v1008 = vpop.f32.mrb[0].mxu0
    %1009 = vdwg.mxu0
    %1010 = vset.pattern.permute.xlu0 2
    %1011 = vperm.xlu0 %1010, %v57
    %v1012 = vpop.permute.xlu0 %1011
    %1014 = vset.pattern.permute.xlu0 2
    %1015 = vperm.xlu0 %1014, %v58
    %v1016 = vpop.permute.xlu0 %1015
    %1019 = vset.pattern.permute.xlu0 2
    %1020 = vperm.xlu0 %1019, %v59
    %v1021 = vpop.permute.xlu0 %1020
    %1024 = vset.pattern.permute.xlu0 2
    %1025 = vperm.xlu0 %1024, %v60
    %v1026 = vpop.permute.xlu0 %1025
    %v1028 = vadd.f32 %v992, %v1012
    %v1029 = vadd.f32 %v997, %v1016
    %v1030 = vadd.f32 %v1002, %v1021
    %v1031 = vadd.f32 %v1007, %v1026
    %v1032 = vmax.f32 %v1028, 0.0
    %v1033 = vmax.f32 %v1029, 0.0
    %v1034 = vmax.f32 %v1030, 0.0
    %v1035 = vmax.f32 %v1031, 0.0
    %v1036 = vmul.f32 %v1032, %v388
    %v1037 = vmul.f32 %v1033, %v388
    %v1038 = vmul.f32 %v1034, %v388
    %v1039 = vmul.f32 %v1035, %v388
    %1040 = vmatprep.subr.mxu0 0.0
    %1041 = vmatpush1.msra.mxu0 %v245
    %1042 = vmatprep.subr.mxu0 0.0
    %1043 = vmatpush1.msra.mxu0 %v246
    %1044 = vmatprep.subr.mxu0 0.0
    %1045 = vmatpush1.msra.mxu0 %v247
    %1046 = vmatprep.subr.mxu0 0.0
    %1047 = vmatpush1.msra.mxu0 %v248
    %1048 = vmatprep.subr.mxu0 0.0
    %1049 = vmatpush1.msra.mxu0 %v249
    %1050 = vmatprep.subr.mxu0 0.0
    %1051 = vmatpush1.msra.mxu0 %v250
    %1052 = vmatprep.subr.mxu0 0.0
    %1053 = vmatpush1.msra.mxu0 %v251
    %1054 = vmatprep.subr.mxu0 0.0
    %1055 = vmatpush1.msra.mxu0 %v252
    %1056 = vmatprep.subr.mxu0 0.0
    %1057 = vmatpush1.msra.mxu0 %v253
    %1058 = vmatprep.subr.mxu0 0.0
    %1059 = vmatpush1.msra.mxu0 %v254
    %1060 = vmatprep.subr.mxu0 0.0
    %1061 = vmatpush1.msra.mxu0 %v255
    %1062 = vmatprep.subr.mxu0 0.0
    %1063 = vmatpush1.msra.mxu0 %v256
    %1064 = vmatprep.subr.mxu0 0.0
    %1065 = vmatpush1.msra.mxu0 %v257
    %1066 = vmatprep.subr.mxu0 0.0
    %1067 = vmatpush1.msra.mxu0 %v258
    %1068 = vmatprep.subr.mxu0 0.0
    %1069 = vmatpush1.msra.mxu0 %v259
    %1070 = vmatprep.subr.mxu0 0.0
    %1071 = vmatpush1.msra.mxu0 %v260
    %1072 = vmatprep.subr.mxu0 0.0
    %1073 = vmatpush1.msra.mxu0 0.0
    %1074 = vmatprep.subr.mxu0 0.0
    %1075 = vmatpush1.msra.mxu0 0.0
    %1076 = vmatprep.subr.mxu0 0.0
    %1077 = vmatpush1.msra.mxu0 0.0
    %1078 = vmatprep.subr.mxu0 0.0
    %1079 = vmatpush1.msra.mxu0 0.0
    %1080 = vmatprep.subr.mxu0 0.0
    %1081 = vmatpush1.msra.mxu0 0.0
    %1082 = vmatprep.subr.mxu0 0.0
    %1083 = vmatpush1.msra.mxu0 0.0
    %1084 = vmatprep.subr.mxu0 0.0
    %1085 = vmatpush1.msra.mxu0 0.0
    %1086 = vmatprep.subr.mxu0 0.0
    %1087 = vmatpush1.msra.mxu0 0.0
    %1088 = vmatprep.subr.mxu0 0.0
    %1089 = vmatpush1.msra.mxu0 0.0
    %1090 = vmatprep.subr.mxu0 0.0
    %1091 = vmatpush1.msra.mxu0 0.0
    %1092 = vmatprep.subr.mxu0 0.0
    %1093 = vmatpush1.msra.mxu0 0.0
    %1094 = vmatprep.subr.mxu0 0.0
    %1095 = vmatpush1.msra.mxu0 0.0
    %1096 = vmatprep.subr.mxu0 0.0
    %1097 = vmatpush1.msra.mxu0 0.0
    %1098 = vmatprep.subr.mxu0 0.0
    %1099 = vmatpush1.msra.mxu0 0.0
    %1100 = vmatprep.subr.mxu0 0.0
    %1101 = vmatpush1.msra.mxu0 0.0
    %1102 = vmatprep.subr.mxu0 0.0
    %1103 = vmatpush1.msra.mxu0 0.0
    %1104 = vmatprep.mubr.f32.mxu0 0.0
    %1105 = vmatmul.mubr.f32.gmra.mrb[0].mxu0 %v1036
    %v1106 = vpop.f32.mrb[0].mxu0
    %v1107 = vadd.f32 0.0, %v1106
    %v1108 = vpop.f32.mrb[0].mxu0
    %1109 = vmatprep.mubr.f32.mxu0 0.0
    %1110 = vmatmul.mubr.f32.gmra.mrb[0].mxu0 %v1037
    %v1111 = vpop.f32.mrb[0].mxu0
    %v1112 = vadd.f32 0.0, %v1111
    %v1113 = vpop.f32.mrb[0].mxu0
    %1114 = vmatprep.mubr.f32.mxu0 0.0
    %1115 = vmatmul.mubr.f32.gmra.mrb[0].mxu0 %v1038
    %v1116 = vpop.f32.mrb[0].mxu0
    %v1117 = vadd.f32 0.0, %v1116
    %v1118 = vpop.f32.mrb[0].mxu0
    %1119 = vmatprep.mubr.f32.mxu0 0.0
    %1120 = vmatmul.mubr.f32.gmra.mrb[0].mxu0 %v1039
    %v1121 = vpop.f32.mrb[0].mxu0
    %v1122 = vadd.f32 0.0, %v1121
    %v1123 = vpop.f32.mrb[0].mxu0
    %1124 = vdwg.mxu0
    %v1125 = vld [vmem:[%s4 + $0x60] sm:$0xf]
    %v1126 = vld [vmem:[%s4 + $0x64] sm:$0xf]
    %v1127 = vld [vmem:[%s4 + $0x68] sm:$0xf]
    %v1128 = vld [vmem:[%s4 + $0x6c] sm:$0xf]
    %v1129 = vld [vmem:[%s4 + $0x70] sm:$0xf]
    %v1130 = vld [vmem:[%s4 + $0x74] sm:$0xf]
    %v1131 = vld [vmem:[%s4 + $0x78] sm:$0xf]
    %v1132 = vld [vmem:[%s4 + $0x7c] sm:$0xf]
    %v1133 = vld [vmem:[%s4 + $0x80] sm:$0xf]
    %v1134 = vunpack.c.l.bf16 %v1125
    %v1135 = vunpack.c.l.bf16 %v1126
    %v1136 = vunpack.c.l.bf16 %v1127
    %v1137 = vunpack.c.l.bf16 %v1128
    %v1138 = vunpack.c.l.bf16 %v1129
    %v1139 = vunpack.c.l.bf16 %v1130
    %v1140 = vunpack.c.l.bf16 %v1131
    %v1141 = vunpack.c.l.bf16 %v1132
    %v1142 = vunpack.c.l.bf16 %v1133
    %1143 = vset.pattern.permute.xlu0 1
    %1144 = vperm.xlu0 %1143, %v57
    %v1145 = vpop.permute.xlu0 %1144
    %1147 = vset.pattern.permute.xlu0 1
    %1148 = vperm.xlu0 %1147, %v58
    %v1149 = vpop.permute.xlu0 %1148
    %1151 = vset.pattern.permute.xlu0 1
    %1152 = vperm.xlu0 %1151, %v59
    %v1153 = vpop.permute.xlu0 %1152
    %1155 = vset.pattern.permute.xlu0 1
    %1156 = vperm.xlu0 %1155, %v60
    %v1157 = vpop.permute.xlu0 %1156
    %1160 = vset.pattern.permute.xlu0 1
    %1161 = vperm.xlu0 %1160, %v61
    %v1162 = vpop.permute.xlu0 %1161
    %1165 = vset.pattern.permute.xlu0 1
    %1166 = vperm.xlu0 %1165, %v62
    %v1167 = vpop.permute.xlu0 %1166
    %1170 = vset.pattern.permute.xlu0 1
    %1171 = vperm.xlu0 %1170, %v63
    %v1172 = vpop.permute.xlu0 %1171
    %1175 = vset.pattern.permute.xlu0 1
    %1176 = vperm.xlu0 %1175, %v64
    %v1177 = vpop.permute.xlu0 %1176
    %1180 = vset.pattern.permute.xlu0 1
    %1181 = vperm.xlu0 %1180, %v65
    %v1182 = vpop.permute.xlu0 %1181
    %v1185 = vsel %vm577, %v1134, 0
    %v1188 = vsel %vm577, %v1135, 0
    %v1191 = vsel %vm577, %v1136, 0
    %v1194 = vsel %vm577, %v1137, 0
    %v1197 = vsel %vm577, %v1138, 0
    %v1200 = vsel %vm577, %v1139, 0
    %v1203 = vsel %vm577, %v1140, 0
    %v1206 = vsel %vm577, %v1141, 0
    %v1209 = vsel %vm577, %v1142, 0
    %1211 = vmatprep.subr.mxu0 0.0
    %1212 = vmatpush1.msra.mxu0 %v657
    %1213 = vmatprep.subr.mxu0 0.0
    %1214 = vmatpush1.msra.mxu0 %v662
    %1215 = vmatprep.subr.mxu0 0.0
    %1216 = vmatpush1.msra.mxu0 %v667
    %1217 = vmatprep.subr.mxu0 0.0
    %1218 = vmatpush1.msra.mxu0 0.0
    %1219 = vmatprep.subr.mxu0 0.0
    %1220 = vmatpush1.msra.mxu0 0.0
    %1221 = vmatprep.subr.mxu0 0.0
    %1222 = vmatpush1.msra.mxu0 0.0
    %1223 = vmatprep.subr.mxu0 0.0
    %1224 = vmatpush1.msra.mxu0 0.0
    %1225 = vmatprep.subr.mxu0 0.0
    %1226 = vmatpush1.msra.mxu0 0.0
    %1227 = vmatprep.subr.mxu0 0.0
    %1228 = vmatpush1.msra.mxu0 0.0
    %1229 = vmatprep.subr.mxu0 0.0
    %1230 = vmatpush1.msra.mxu0 0.0
    %1231 = vmatprep.subr.mxu0 0.0
    %1232 = vmatpush1.msra.mxu0 0.0
    %1233 = vmatprep.subr.mxu0 0.0
    %1234 = vmatpush1.msra.mxu0 0.0
    %1235 = vmatprep.subr.mxu0 0.0
    %1236 = vmatpush1.msra.mxu0 0.0
    %1237 = vmatprep.subr.mxu0 0.0
    %1238 = vmatpush1.msra.mxu0 0.0
    %1239 = vmatprep.subr.mxu0 0.0
    %1240 = vmatpush1.msra.mxu0 0.0
    %1241 = vmatprep.subr.mxu0 0.0
    %1242 = vmatpush1.msra.mxu0 0.0
    %1243 = vmatprep.subr.mxu0 0.0
    %1244 = vmatpush1.msra.mxu0 0.0
    %1245 = vmatprep.subr.mxu0 0.0
    %1246 = vmatpush1.msra.mxu0 0.0
    %1247 = vmatprep.subr.mxu0 0.0
    %1248 = vmatpush1.msra.mxu0 0.0
    %1249 = vmatprep.subr.mxu0 0.0
    %1250 = vmatpush1.msra.mxu0 0.0
    %1251 = vmatprep.subr.mxu0 0.0
    %1252 = vmatpush1.msra.mxu0 0.0
    %1253 = vmatprep.subr.mxu0 0.0
    %1254 = vmatpush1.msra.mxu0 0.0
    %1255 = vmatprep.subr.mxu0 0.0
    %1256 = vmatpush1.msra.mxu0 0.0
    %1257 = vmatprep.subr.mxu0 0.0
    %1258 = vmatpush1.msra.mxu0 0.0
    %1259 = vmatprep.subr.mxu0 0.0
    %1260 = vmatpush1.msra.mxu0 0.0
    %1261 = vmatprep.subr.mxu0 0.0
    %1262 = vmatpush1.msra.mxu0 0.0
    %1263 = vmatprep.subr.mxu0 0.0
    %1264 = vmatpush1.msra.mxu0 0.0
    %1265 = vmatprep.subr.mxu0 0.0
    %1266 = vmatpush1.msra.mxu0 0.0
    %1267 = vmatprep.subr.mxu0 0.0
    %1268 = vmatpush1.msra.mxu0 0.0
    %1269 = vmatprep.subr.mxu0 0.0
    %1270 = vmatpush1.msra.mxu0 0.0
    %1271 = vmatprep.subr.mxu0 0.0
    %1272 = vmatpush1.msra.mxu0 0.0
    %1273 = vmatprep.subr.mxu0 0.0
    %1274 = vmatpush1.msra.mxu0 0.0
    %1275 = vmatprep.mubr.f32.mxu0 0.0
    %1276 = vmatmul.mubr.f32.gmra.mrb[0].mxu0 %v1185
    %v1277 = vpop.f32.mrb[0].mxu0
    %v1278 = vadd.f32 %v1145, %v1277
    %v1279 = vpop.f32.mrb[0].mxu0
    %1280 = vmatprep.mubr.f32.mxu0 0.0
    %1281 = vmatmul.mubr.f32.gmra.mrb[0].mxu0 %v1188
    %v1282 = vpop.f32.mrb[0].mxu0
    %v1283 = vadd.f32 %v1149, %v1282
    %v1284 = vpop.f32.mrb[0].mxu0
    %1285 = vmatprep.mubr.f32.mxu0 0.0
    %1286 = vmatmul.mubr.f32.gmra.mrb[0].mxu0 %v1191
    %v1287 = vpop.f32.mrb[0].mxu0
    %v1288 = vadd.f32 %v1153, %v1287
    %v1289 = vpop.f32.mrb[0].mxu0
    %1290 = vmatprep.mubr.f32.mxu0 0.0
    %1291 = vmatmul.mubr.f32.gmra.mrb[0].mxu0 %v1194
    %v1292 = vpop.f32.mrb[0].mxu0
    %v1293 = vadd.f32 %v1157, %v1292
    %v1294 = vpop.f32.mrb[0].mxu0
    %1295 = vmatprep.mubr.f32.mxu0 0.0
    %1296 = vmatmul.mubr.f32.gmra.mrb[0].mxu0 %v1197
    %v1297 = vpop.f32.mrb[0].mxu0
    %v1298 = vadd.f32 %v1162, %v1297
    %v1299 = vpop.f32.mrb[0].mxu0
    %1300 = vmatprep.mubr.f32.mxu0 0.0
    %1301 = vmatmul.mubr.f32.gmra.mrb[0].mxu0 %v1200
    %v1302 = vpop.f32.mrb[0].mxu0
    %v1303 = vadd.f32 %v1167, %v1302
    %v1304 = vpop.f32.mrb[0].mxu0
    %1305 = vmatprep.mubr.f32.mxu0 0.0
    %1306 = vmatmul.mubr.f32.gmra.mrb[0].mxu0 %v1203
    %v1307 = vpop.f32.mrb[0].mxu0
    %v1308 = vadd.f32 %v1172, %v1307
    %v1309 = vpop.f32.mrb[0].mxu0
    %1310 = vmatprep.mubr.f32.mxu0 0.0
    %1311 = vmatmul.mubr.f32.gmra.mrb[0].mxu0 %v1206
    %v1312 = vpop.f32.mrb[0].mxu0
    %v1313 = vadd.f32 %v1177, %v1312
    %v1314 = vpop.f32.mrb[0].mxu0
    %1315 = vmatprep.mubr.f32.mxu0 0.0
    %1316 = vmatmul.mubr.f32.gmra.mrb[0].mxu0 %v1209
    %v1317 = vpop.f32.mrb[0].mxu0
    %v1318 = vadd.f32 %v1182, %v1317
    %v1319 = vpop.f32.mrb[0].mxu0
    %1320 = vdwg.mxu0
    %v1322 = vsel %vm429, %v672, 0
    %v1325 = vsel %vm429, %v673, 0
    %1327 = vmatprep.subr.mxu0 0.0
    %1328 = vmatpush1.msra.mxu0 %v557
    %1329 = vmatprep.subr.mxu0 0.0
    %1330 = vmatpush1.msra.mxu0 %v562
    %1331 = vmatprep.subr.mxu0 0.0
    %1332 = vmatpush1.msra.mxu0 %v567
    %1333 = vmatprep.subr.mxu0 0.0
    %1334 = vmatpush1.msra.mxu0 %v572
    %1335 = vmatprep.subr.mxu0 0.0
    %1336 = vmatpush1.msra.mxu0 0.0
    %1337 = vmatprep.subr.mxu0 0.0
    %1338 = vmatpush1.msra.mxu0 0.0
    %1339 = vmatprep.subr.mxu0 0.0
    %1340 = vmatpush1.msra.mxu0 0.0
    %1341 = vmatprep.subr.mxu0 0.0
    %1342 = vmatpush1.msra.mxu0 0.0
    %1343 = vmatprep.subr.mxu0 0.0
    %1344 = vmatpush1.msra.mxu0 0.0
    %1345 = vmatprep.subr.mxu0 0.0
    %1346 = vmatpush1.msra.mxu0 0.0
    %1347 = vmatprep.subr.mxu0 0.0
    %1348 = vmatpush1.msra.mxu0 0.0
    %1349 = vmatprep.subr.mxu0 0.0
    %1350 = vmatpush1.msra.mxu0 0.0
    %1351 = vmatprep.subr.mxu0 0.0
    %1352 = vmatpush1.msra.mxu0 0.0
    %1353 = vmatprep.subr.mxu0 0.0
    %1354 = vmatpush1.msra.mxu0 0.0
    %1355 = vmatprep.subr.mxu0 0.0
    %1356 = vmatpush1.msra.mxu0 0.0
    %1357 = vmatprep.subr.mxu0 0.0
    %1358 = vmatpush1.msra.mxu0 0.0
    %1359 = vmatprep.subr.mxu0 0.0
    %1360 = vmatpush1.msra.mxu0 0.0
    %1361 = vmatprep.subr.mxu0 0.0
    %1362 = vmatpush1.msra.mxu0 0.0
    %1363 = vmatprep.subr.mxu0 0.0
    %1364 = vmatpush1.msra.mxu0 0.0
    %1365 = vmatprep.subr.mxu0 0.0
    %1366 = vmatpush1.msra.mxu0 0.0
    %1367 = vmatprep.subr.mxu0 0.0
    %1368 = vmatpush1.msra.mxu0 0.0
    %1369 = vmatprep.subr.mxu0 0.0
    %1370 = vmatpush1.msra.mxu0 0.0
    %1371 = vmatprep.subr.mxu0 0.0
    %1372 = vmatpush1.msra.mxu0 0.0
    %1373 = vmatprep.subr.mxu0 0.0
    %1374 = vmatpush1.msra.mxu0 0.0
    %1375 = vmatprep.subr.mxu0 0.0
    %1376 = vmatpush1.msra.mxu0 0.0
    %1377 = vmatprep.subr.mxu0 0.0
    %1378 = vmatpush1.msra.mxu0 0.0
    %1379 = vmatprep.subr.mxu0 0.0
    %1380 = vmatpush1.msra.mxu0 0.0
    %1381 = vmatprep.subr.mxu0 0.0
    %1382 = vmatpush1.msra.mxu0 0.0
    %1383 = vmatprep.subr.mxu0 0.0
    %1384 = vmatpush1.msra.mxu0 0.0
    %1385 = vmatprep.subr.mxu0 0.0
    %1386 = vmatpush1.msra.mxu0 0.0
    %1387 = vmatprep.subr.mxu0 0.0
    %1388 = vmatpush1.msra.mxu0 0.0
    %1389 = vmatprep.subr.mxu0 0.0
    %1390 = vmatpush1.msra.mxu0 0.0
    %1391 = vmatprep.mubr.f32.mxu0 0.0
    %1392 = vmatmul.mubr.f32.gmra.mrb[0].mxu0 %v1322
    %v1393 = vpop.f32.mrb[0].mxu0
    %v1394 = vadd.f32 %v683, %v1393
    %v1395 = vpop.f32.mrb[0].mxu0
    %1396 = vmatprep.mubr.f32.mxu0 0.0
    %1397 = vmatmul.mubr.f32.gmra.mrb[0].mxu0 %v1325
    %v1398 = vpop.f32.mrb[0].mxu0
    %v1399 = vadd.f32 %v688, %v1398
    %v1400 = vpop.f32.mrb[0].mxu0
    %1401 = vdwg.mxu0
    %v1402 = vmax.f32 %v1394, 0.0
    %v1403 = vmax.f32 %v1399, 0.0
    %v1405 = vsel %vm912, %v676, 0
    %v1408 = vsel %vm912, %v677, 0
    %1410 = vmatprep.subr.mxu0 0.0
    %1411 = vmatpush1.msra.mxu0 %v1402
    %1412 = vmatprep.subr.mxu0 0.0
    %1413 = vmatpush1.msra.mxu0 %v1403
    %1414 = vmatprep.subr.mxu0 0.0
    %1415 = vmatpush1.msra.mxu0 0.0
    %1416 = vmatprep.subr.mxu0 0.0
    %1417 = vmatpush1.msra.mxu0 0.0
    %1418 = vmatprep.subr.mxu0 0.0
    %1419 = vmatpush1.msra.mxu0 0.0
    %1420 = vmatprep.subr.mxu0 0.0
    %1421 = vmatpush1.msra.mxu0 0.0
    %1422 = vmatprep.subr.mxu0 0.0
    %1423 = vmatpush1.msra.mxu0 0.0
    %1424 = vmatprep.subr.mxu0 0.0
    %1425 = vmatpush1.msra.mxu0 0.0
    %1426 = vmatprep.subr.mxu0 0.0
    %1427 = vmatpush1.msra.mxu0 0.0
    %1428 = vmatprep.subr.mxu0 0.0
    %1429 = vmatpush1.msra.mxu0 0.0
    %1430 = vmatprep.subr.mxu0 0.0
    %1431 = vmatpush1.msra.mxu0 0.0
    %1432 = vmatprep.subr.mxu0 0.0
    %1433 = vmatpush1.msra.mxu0 0.0
    %1434 = vmatprep.subr.mxu0 0.0
    %1435 = vmatpush1.msra.mxu0 0.0
    %1436 = vmatprep.subr.mxu0 0.0
    %1437 = vmatpush1.msra.mxu0 0.0
    %1438 = vmatprep.subr.mxu0 0.0
    %1439 = vmatpush1.msra.mxu0 0.0
    %1440 = vmatprep.subr.mxu0 0.0
    %1441 = vmatpush1.msra.mxu0 0.0
    %1442 = vmatprep.subr.mxu0 0.0
    %1443 = vmatpush1.msra.mxu0 0.0
    %1444 = vmatprep.subr.mxu0 0.0
    %1445 = vmatpush1.msra.mxu0 0.0
    %1446 = vmatprep.subr.mxu0 0.0
    %1447 = vmatpush1.msra.mxu0 0.0
    %1448 = vmatprep.subr.mxu0 0.0
    %1449 = vmatpush1.msra.mxu0 0.0
    %1450 = vmatprep.subr.mxu0 0.0
    %1451 = vmatpush1.msra.mxu0 0.0
    %1452 = vmatprep.subr.mxu0 0.0
    %1453 = vmatpush1.msra.mxu0 0.0
    %1454 = vmatprep.subr.mxu0 0.0
    %1455 = vmatpush1.msra.mxu0 0.0
    %1456 = vmatprep.subr.mxu0 0.0
    %1457 = vmatpush1.msra.mxu0 0.0
    %1458 = vmatprep.subr.mxu0 0.0
    %1459 = vmatpush1.msra.mxu0 0.0
    %1460 = vmatprep.subr.mxu0 0.0
    %1461 = vmatpush1.msra.mxu0 0.0
    %1462 = vmatprep.subr.mxu0 0.0
    %1463 = vmatpush1.msra.mxu0 0.0
    %1464 = vmatprep.subr.mxu0 0.0
    %1465 = vmatpush1.msra.mxu0 0.0
    %1466 = vmatprep.subr.mxu0 0.0
    %1467 = vmatpush1.msra.mxu0 0.0
    %1468 = vmatprep.subr.mxu0 0.0
    %1469 = vmatpush1.msra.mxu0 0.0
    %1470 = vmatprep.subr.mxu0 0.0
    %1471 = vmatpush1.msra.mxu0 0.0
    %1472 = vmatprep.subr.mxu0 0.0
    %1473 = vmatpush1.msra.mxu0 0.0
    %1474 = vmatprep.mubr.f32.mxu0 0.0
    %1475 = vmatmul.mubr.f32.gmra.mrb[0].mxu0 %v1405
    %v1476 = vpop.f32.mrb[0].mxu0
    %v1477 = vadd.f32 %v692, %v1476
    %v1478 = vpop.f32.mrb[0].mxu0
    %1479 = vmatprep.mubr.f32.mxu0 0.0
    %1480 = vmatmul.mubr.f32.gmra.mrb[0].mxu0 %v1408
    %v1481 = vpop.f32.mrb[0].mxu0
    %v1482 = vadd.f32 %v696, %v1481
    %v1483 = vpop.f32.mrb[0].mxu0
    %1484 = vdwg.mxu0
    %v1485 = vmax.f32 %v1477, 0.0
    %v1486 = vmax.f32 %v1482, 0.0
    %v1488 = vsel %vm912, %v679, 0
    %1490 = vmatprep.subr.mxu0 0.0
    %1491 = vmatpush1.msra.mxu0 %v1485
    %1492 = vmatprep.subr.mxu0 0.0
    %1493 = vmatpush1.msra.mxu0 %v1486
    %1494 = vmatprep.subr.mxu0 0.0
    %1495 = vmatpush1.msra.mxu0 0.0
    %1496 = vmatprep.subr.mxu0 0.0
    %1497 = vmatpush1.msra.mxu0 0.0
    %1498 = vmatprep.subr.mxu0 0.0
    %1499 = vmatpush1.msra.mxu0 0.0
    %1500 = vmatprep.subr.mxu0 0.0
    %1501 = vmatpush1.msra.mxu0 0.0
    %1502 = vmatprep.subr.mxu0 0.0
    %1503 = vmatpush1.msra.mxu0 0.0
    %1504 = vmatprep.subr.mxu0 0.0
    %1505 = vmatpush1.msra.mxu0 0.0
    %1506 = vmatprep.subr.mxu0 0.0
    %1507 = vmatpush1.msra.mxu0 0.0
    %1508 = vmatprep.subr.mxu0 0.0
    %1509 = vmatpush1.msra.mxu0 0.0
    %1510 = vmatprep.subr.mxu0 0.0
    %1511 = vmatpush1.msra.mxu0 0.0
    %1512 = vmatprep.subr.mxu0 0.0
    %1513 = vmatpush1.msra.mxu0 0.0
    %1514 = vmatprep.subr.mxu0 0.0
    %1515 = vmatpush1.msra.mxu0 0.0
    %1516 = vmatprep.subr.mxu0 0.0
    %1517 = vmatpush1.msra.mxu0 0.0
    %1518 = vmatprep.subr.mxu0 0.0
    %1519 = vmatpush1.msra.mxu0 0.0
    %1520 = vmatprep.subr.mxu0 0.0
    %1521 = vmatpush1.msra.mxu0 0.0
    %1522 = vmatprep.subr.mxu0 0.0
    %1523 = vmatpush1.msra.mxu0 0.0
    %1524 = vmatprep.subr.mxu0 0.0
    %1525 = vmatpush1.msra.mxu0 0.0
    %1526 = vmatprep.subr.mxu0 0.0
    %1527 = vmatpush1.msra.mxu0 0.0
    %1528 = vmatprep.subr.mxu0 0.0
    %1529 = vmatpush1.msra.mxu0 0.0
    %1530 = vmatprep.subr.mxu0 0.0
    %1531 = vmatpush1.msra.mxu0 0.0
    %1532 = vmatprep.subr.mxu0 0.0
    %1533 = vmatpush1.msra.mxu0 0.0
    %1534 = vmatprep.subr.mxu0 0.0
    %1535 = vmatpush1.msra.mxu0 0.0
    %1536 = vmatprep.subr.mxu0 0.0
    %1537 = vmatpush1.msra.mxu0 0.0
    %1538 = vmatprep.subr.mxu0 0.0
    %1539 = vmatpush1.msra.mxu0 0.0
    %1540 = vmatprep.subr.mxu0 0.0
    %1541 = vmatpush1.msra.mxu0 0.0
    %1542 = vmatprep.subr.mxu0 0.0
    %1543 = vmatpush1.msra.mxu0 0.0
    %1544 = vmatprep.subr.mxu0 0.0
    %1545 = vmatpush1.msra.mxu0 0.0
    %1546 = vmatprep.subr.mxu0 0.0
    %1547 = vmatpush1.msra.mxu0 0.0
    %1548 = vmatprep.subr.mxu0 0.0
    %1549 = vmatpush1.msra.mxu0 0.0
    %1550 = vmatprep.subr.mxu0 0.0
    %1551 = vmatpush1.msra.mxu0 0.0
    %1552 = vmatprep.subr.mxu0 0.0
    %1553 = vmatpush1.msra.mxu0 0.0
    %1554 = vmatprep.mubr.f32.mxu0 0.0
    %1555 = vmatmul.mubr.f32.gmra.mrb[0].mxu0 %v1488
    %v1556 = vpop.f32.mrb[0].mxu0
    %v1557 = vadd.f32 %v700, %v1556
    %v1558 = vpop.f32.mrb[0].mxu0
    %1559 = vdwg.mxu0
    %v1560 = vmul.f32 %v1557, %v388
    %v1561 = vmul.f32 %v1560, 0.5
    %v1562 = vtanh.pop %v1561
    %v1563 = vadd.f32 %v1562, 1.0
    %v1564 = vmul.f32 %v1563, 0.5
    %1565 = vmatprep.subr.mxu0 0.0
    %1566 = vmatpush1.msra.mxu0 %v245
    %1567 = vmatprep.subr.mxu0 0.0
    %1568 = vmatpush1.msra.mxu0 %v246
    %1569 = vmatprep.subr.mxu0 0.0
    %1570 = vmatpush1.msra.mxu0 %v247
    %1571 = vmatprep.subr.mxu0 0.0
    %1572 = vmatpush1.msra.mxu0 %v248
    %1573 = vmatprep.subr.mxu0 0.0
    %1574 = vmatpush1.msra.mxu0 %v249
    %1575 = vmatprep.subr.mxu0 0.0
    %1576 = vmatpush1.msra.mxu0 %v250
    %1577 = vmatprep.subr.mxu0 0.0
    %1578 = vmatpush1.msra.mxu0 %v251
    %1579 = vmatprep.subr.mxu0 0.0
    %1580 = vmatpush1.msra.mxu0 %v252
    %1581 = vmatprep.subr.mxu0 0.0
    %1582 = vmatpush1.msra.mxu0 %v253
    %1583 = vmatprep.subr.mxu0 0.0
    %1584 = vmatpush1.msra.mxu0 %v254
    %1585 = vmatprep.subr.mxu0 0.0
    %1586 = vmatpush1.msra.mxu0 %v255
    %1587 = vmatprep.subr.mxu0 0.0
    %1588 = vmatpush1.msra.mxu0 %v256
    %1589 = vmatprep.subr.mxu0 0.0
    %1590 = vmatpush1.msra.mxu0 %v257
    %1591 = vmatprep.subr.mxu0 0.0
    %1592 = vmatpush1.msra.mxu0 %v258
    %1593 = vmatprep.subr.mxu0 0.0
    %1594 = vmatpush1.msra.mxu0 %v259
    %1595 = vmatprep.subr.mxu0 0.0
    %1596 = vmatpush1.msra.mxu0 %v260
    %1597 = vmatprep.subr.mxu0 0.0
    %1598 = vmatpush1.msra.mxu0 0.0
    %1599 = vmatprep.subr.mxu0 0.0
    %1600 = vmatpush1.msra.mxu0 0.0
    %1601 = vmatprep.subr.mxu0 0.0
    %1602 = vmatpush1.msra.mxu0 0.0
    %1603 = vmatprep.subr.mxu0 0.0
    %1604 = vmatpush1.msra.mxu0 0.0
    %1605 = vmatprep.subr.mxu0 0.0
    %1606 = vmatpush1.msra.mxu0 0.0
    %1607 = vmatprep.subr.mxu0 0.0
    %1608 = vmatpush1.msra.mxu0 0.0
    %1609 = vmatprep.subr.mxu0 0.0
    %1610 = vmatpush1.msra.mxu0 0.0
    %1611 = vmatprep.subr.mxu0 0.0
    %1612 = vmatpush1.msra.mxu0 0.0
    %1613 = vmatprep.subr.mxu0 0.0
    %1614 = vmatpush1.msra.mxu0 0.0
    %1615 = vmatprep.subr.mxu0 0.0
    %1616 = vmatpush1.msra.mxu0 0.0
    %1617 = vmatprep.subr.mxu0 0.0
    %1618 = vmatpush1.msra.mxu0 0.0
    %1619 = vmatprep.subr.mxu0 0.0
    %1620 = vmatpush1.msra.mxu0 0.0
    %1621 = vmatprep.subr.mxu0 0.0
    %1622 = vmatpush1.msra.mxu0 0.0
    %1623 = vmatprep.subr.mxu0 0.0
    %1624 = vmatpush1.msra.mxu0 0.0
    %1625 = vmatprep.subr.mxu0 0.0
    %1626 = vmatpush1.msra.mxu0 0.0
    %1627 = vmatprep.subr.mxu0 0.0
    %1628 = vmatpush1.msra.mxu0 0.0
    %1629 = vmatprep.mubr.f32.mxu0 0.0
    %1630 = vmatmul.mubr.f32.gmra.mrb[0].mxu0 %v1564
    %v1631 = vpop.f32.mrb[0].mxu0
    %v1632 = vadd.f32 0.0, %v1631
    %v1633 = vpop.f32.mrb[0].mxu0
    %1634 = vdwg.mxu0
    %v1635 = vlaneseq
    %v1636 = vshrl.u32 %v1635, 7
    %v1637 = vsub.s32 0, %v1636
    %v1638 = vrot.slane %v1632, %v1637
    %v1639 = vmul.f32 %v1107, %v1638
    %v1640 = vmul.f32 %v1112, %v1638
    %v1641 = vmul.f32 %v1117, %v1638
    %v1642 = vmul.f32 %v1122, %v1638
    %1643 = vmatprep.subr.mxu0 0.0
    %1644 = vmatpush1.msra.mxu0 %v1639
    %1645 = vmatprep.subr.mxu0 0.0
    %1646 = vmatpush1.msra.mxu0 %v1640
    %1647 = vmatprep.subr.mxu0 0.0
    %1648 = vmatpush1.msra.mxu0 %v1641
    %1649 = vmatprep.subr.mxu0 0.0
    %1650 = vmatpush1.msra.mxu0 %v1642
    %1651 = vmatprep.subr.mxu0 0.0
    %1652 = vmatpush1.msra.mxu0 0.0
    %1653 = vmatprep.subr.mxu0 0.0
    %1654 = vmatpush1.msra.mxu0 0.0
    %1655 = vmatprep.subr.mxu0 0.0
    %1656 = vmatpush1.msra.mxu0 0.0
    %1657 = vmatprep.subr.mxu0 0.0
    %1658 = vmatpush1.msra.mxu0 0.0
    %1659 = vmatprep.subr.mxu0 0.0
    %1660 = vmatpush1.msra.mxu0 0.0
    %1661 = vmatprep.subr.mxu0 0.0
    %1662 = vmatpush1.msra.mxu0 0.0
    %1663 = vmatprep.subr.mxu0 0.0
    %1664 = vmatpush1.msra.mxu0 0.0
    %1665 = vmatprep.subr.mxu0 0.0
    %1666 = vmatpush1.msra.mxu0 0.0
    %1667 = vmatprep.subr.mxu0 0.0
    %1668 = vmatpush1.msra.mxu0 0.0
    %1669 = vmatprep.subr.mxu0 0.0
    %1670 = vmatpush1.msra.mxu0 0.0
    %1671 = vmatprep.subr.mxu0 0.0
    %1672 = vmatpush1.msra.mxu0 0.0
    %1673 = vmatprep.subr.mxu0 0.0
    %1674 = vmatpush1.msra.mxu0 0.0
    %1675 = vmatprep.subr.mxu0 0.0
    %1676 = vmatpush1.msra.mxu0 0.0
    %1677 = vmatprep.subr.mxu0 0.0
    %1678 = vmatpush1.msra.mxu0 0.0
    %1679 = vmatprep.subr.mxu0 0.0
    %1680 = vmatpush1.msra.mxu0 0.0
    %1681 = vmatprep.subr.mxu0 0.0
    %1682 = vmatpush1.msra.mxu0 0.0
    %1683 = vmatprep.subr.mxu0 0.0
    %1684 = vmatpush1.msra.mxu0 0.0
    %1685 = vmatprep.subr.mxu0 0.0
    %1686 = vmatpush1.msra.mxu0 0.0
    %1687 = vmatprep.subr.mxu0 0.0
    %1688 = vmatpush1.msra.mxu0 0.0
    %1689 = vmatprep.subr.mxu0 0.0
    %1690 = vmatpush1.msra.mxu0 0.0
    %1691 = vmatprep.subr.mxu0 0.0
    %1692 = vmatpush1.msra.mxu0 0.0
    %1693 = vmatprep.subr.mxu0 0.0
    %1694 = vmatpush1.msra.mxu0 0.0
    %1695 = vmatprep.subr.mxu0 0.0
    %1696 = vmatpush1.msra.mxu0 0.0
    %1697 = vmatprep.subr.mxu0 0.0
    %1698 = vmatpush1.msra.mxu0 0.0
    %1699 = vmatprep.subr.mxu0 0.0
    %1700 = vmatpush1.msra.mxu0 0.0
    %1701 = vmatprep.subr.mxu0 0.0
    %1702 = vmatpush1.msra.mxu0 0.0
    %1703 = vmatprep.subr.mxu0 0.0
    %1704 = vmatpush1.msra.mxu0 0.0
    %1705 = vmatprep.subr.mxu0 0.0
    %1706 = vmatpush1.msra.mxu0 0.0
    %1707 = vmatprep.mubr.f32.mxu0 0.0
    %1708 = vmatmul.mubr.f32.gmra.mrb[0].mxu0 %v1322
    %v1709 = vpop.f32.mrb[0].mxu0
    %v1710 = vadd.f32 %v683, %v1709
    %v1711 = vpop.f32.mrb[0].mxu0
    %1712 = vmatprep.mubr.f32.mxu0 0.0
    %1713 = vmatmul.mubr.f32.gmra.mrb[0].mxu0 %v1325
    %v1714 = vpop.f32.mrb[0].mxu0
    %v1715 = vadd.f32 %v688, %v1714
    %v1716 = vpop.f32.mrb[0].mxu0
    %1717 = vdwg.mxu0
    %v1718 = vmax.f32 %v1710, 0.0
    %v1719 = vmax.f32 %v1715, 0.0
    %1720 = vmatprep.subr.mxu0 0.0
    %1721 = vmatpush1.msra.mxu0 %v1718
    %1722 = vmatprep.subr.mxu0 0.0
    %1723 = vmatpush1.msra.mxu0 %v1719
    %1724 = vmatprep.subr.mxu0 0.0
    %1725 = vmatpush1.msra.mxu0 0.0
    %1726 = vmatprep.subr.mxu0 0.0
    %1727 = vmatpush1.msra.mxu0 0.0
    %1728 = vmatprep.subr.mxu0 0.0
    %1729 = vmatpush1.msra.mxu0 0.0
    %1730 = vmatprep.subr.mxu0 0.0
    %1731 = vmatpush1.msra.mxu0 0.0
    %1732 = vmatprep.subr.mxu0 0.0
    %1733 = vmatpush1.msra.mxu0 0.0
    %1734 = vmatprep.subr.mxu0 0.0
    %1735 = vmatpush1.msra.mxu0 0.0
    %1736 = vmatprep.subr.mxu0 0.0
    %1737 = vmatpush1.msra.mxu0 0.0
    %1738 = vmatprep.subr.mxu0 0.0
    %1739 = vmatpush1.msra.mxu0 0.0
    %1740 = vmatprep.subr.mxu0 0.0
    %1741 = vmatpush1.msra.mxu0 0.0
    %1742 = vmatprep.subr.mxu0 0.0
    %1743 = vmatpush1.msra.mxu0 0.0
    %1744 = vmatprep.subr.mxu0 0.0
    %1745 = vmatpush1.msra.mxu0 0.0
    %1746 = vmatprep.subr.mxu0 0.0
    %1747 = vmatpush1.msra.mxu0 0.0
    %1748 = vmatprep.subr.mxu0 0.0
    %1749 = vmatpush1.msra.mxu0 0.0
    %1750 = vmatprep.subr.mxu0 0.0
    %1751 = vmatpush1.msra.mxu0 0.0
    %1752 = vmatprep.subr.mxu0 0.0
    %1753 = vmatpush1.msra.mxu0 0.0
    %1754 = vmatprep.subr.mxu0 0.0
    %1755 = vmatpush1.msra.mxu0 0.0
    %1756 = vmatprep.subr.mxu0 0.0
    %1757 = vmatpush1.msra.mxu0 0.0
    %1758 = vmatprep.subr.mxu0 0.0
    %1759 = vmatpush1.msra.mxu0 0.0
    %1760 = vmatprep.subr.mxu0 0.0
    %1761 = vmatpush1.msra.mxu0 0.0
    %1762 = vmatprep.subr.mxu0 0.0
    %1763 = vmatpush1.msra.mxu0 0.0
    %1764 = vmatprep.subr.mxu0 0.0
    %1765 = vmatpush1.msra.mxu0 0.0
    %1766 = vmatprep.subr.mxu0 0.0
    %1767 = vmatpush1.msra.mxu0 0.0
    %1768 = vmatprep.subr.mxu0 0.0
    %1769 = vmatpush1.msra.mxu0 0.0
    %1770 = vmatprep.subr.mxu0 0.0
    %1771 = vmatpush1.msra.mxu0 0.0
    %1772 = vmatprep.subr.mxu0 0.0
    %1773 = vmatpush1.msra.mxu0 0.0
    %1774 = vmatprep.subr.mxu0 0.0
    %1775 = vmatpush1.msra.mxu0 0.0
    %1776 = vmatprep.subr.mxu0 0.0
    %1777 = vmatpush1.msra.mxu0 0.0
    %1778 = vmatprep.subr.mxu0 0.0
    %1779 = vmatpush1.msra.mxu0 0.0
    %1780 = vmatprep.subr.mxu0 0.0
    %1781 = vmatpush1.msra.mxu0 0.0
    %1782 = vmatprep.subr.mxu0 0.0
    %1783 = vmatpush1.msra.mxu0 0.0
    %1784 = vmatprep.mubr.f32.mxu0 0.0
    %1785 = vmatmul.mubr.f32.gmra.mrb[0].mxu0 %v1405
    %v1786 = vpop.f32.mrb[0].mxu0
    %v1787 = vadd.f32 %v692, %v1786
    %v1788 = vpop.f32.mrb[0].mxu0
    %1789 = vmatprep.mubr.f32.mxu0 0.0
    %1790 = vmatmul.mubr.f32.gmra.mrb[0].mxu0 %v1408
    %v1791 = vpop.f32.mrb[0].mxu0
    %v1792 = vadd.f32 %v696, %v1791
    %v1793 = vpop.f32.mrb[0].mxu0
    %1794 = vdwg.mxu0
    %v1795 = vmax.f32 %v1787, 0.0
    %v1796 = vmax.f32 %v1792, 0.0
    %1797 = vmatprep.subr.mxu0 0.0
    %1798 = vmatpush1.msra.mxu0 %v1795
    %1799 = vmatprep.subr.mxu0 0.0
    %1800 = vmatpush1.msra.mxu0 %v1796
    %1801 = vmatprep.subr.mxu0 0.0
    %1802 = vmatpush1.msra.mxu0 0.0
    %1803 = vmatprep.subr.mxu0 0.0
    %1804 = vmatpush1.msra.mxu0 0.0
    %1805 = vmatprep.subr.mxu0 0.0
    %1806 = vmatpush1.msra.mxu0 0.0
    %1807 = vmatprep.subr.mxu0 0.0
    %1808 = vmatpush1.msra.mxu0 0.0
    %1809 = vmatprep.subr.mxu0 0.0
    %1810 = vmatpush1.msra.mxu0 0.0
    %1811 = vmatprep.subr.mxu0 0.0
    %1812 = vmatpush1.msra.mxu0 0.0
    %1813 = vmatprep.subr.mxu0 0.0
    %1814 = vmatpush1.msra.mxu0 0.0
    %1815 = vmatprep.subr.mxu0 0.0
    %1816 = vmatpush1.msra.mxu0 0.0
    %1817 = vmatprep.subr.mxu0 0.0
    %1818 = vmatpush1.msra.mxu0 0.0
    %1819 = vmatprep.subr.mxu0 0.0
    %1820 = vmatpush1.msra.mxu0 0.0
    %1821 = vmatprep.subr.mxu0 0.0
    %1822 = vmatpush1.msra.mxu0 0.0
    %1823 = vmatprep.subr.mxu0 0.0
    %1824 = vmatpush1.msra.mxu0 0.0
    %1825 = vmatprep.subr.mxu0 0.0
    %1826 = vmatpush1.msra.mxu0 0.0
    %1827 = vmatprep.subr.mxu0 0.0
    %1828 = vmatpush1.msra.mxu0 0.0
    %1829 = vmatprep.subr.mxu0 0.0
    %1830 = vmatpush1.msra.mxu0 0.0
    %1831 = vmatprep.subr.mxu0 0.0
    %1832 = vmatpush1.msra.mxu0 0.0
    %1833 = vmatprep.subr.mxu0 0.0
    %1834 = vmatpush1.msra.mxu0 0.0
    %1835 = vmatprep.subr.mxu0 0.0
    %1836 = vmatpush1.msra.mxu0 0.0
    %1837 = vmatprep.subr.mxu0 0.0
    %1838 = vmatpush1.msra.mxu0 0.0
    %1839 = vmatprep.subr.mxu0 0.0
    %1840 = vmatpush1.msra.mxu0 0.0
    %1841 = vmatprep.subr.mxu0 0.0
    %1842 = vmatpush1.msra.mxu0 0.0
    %1843 = vmatprep.subr.mxu0 0.0
    %1844 = vmatpush1.msra.mxu0 0.0
    %1845 = vmatprep.subr.mxu0 0.0
    %1846 = vmatpush1.msra.mxu0 0.0
    %1847 = vmatprep.subr.mxu0 0.0
    %1848 = vmatpush1.msra.mxu0 0.0
    %1849 = vmatprep.subr.mxu0 0.0
    %1850 = vmatpush1.msra.mxu0 0.0
    %1851 = vmatprep.subr.mxu0 0.0
    %1852 = vmatpush1.msra.mxu0 0.0
    %1853 = vmatprep.subr.mxu0 0.0
    %1854 = vmatpush1.msra.mxu0 0.0
    %1855 = vmatprep.subr.mxu0 0.0
    %1856 = vmatpush1.msra.mxu0 0.0
    %1857 = vmatprep.subr.mxu0 0.0
    %1858 = vmatpush1.msra.mxu0 0.0
    %1859 = vmatprep.subr.mxu0 0.0
    %1860 = vmatpush1.msra.mxu0 0.0
    %1861 = vmatprep.mubr.f32.mxu0 0.0
    %1862 = vmatmul.mubr.f32.gmra.mrb[0].mxu0 %v1488
    %v1863 = vpop.f32.mrb[0].mxu0
    %v1864 = vadd.f32 %v700, %v1863
    %v1865 = vpop.f32.mrb[0].mxu0
    %1866 = vdwg.mxu0
    %v1867 = vmul.f32 %v1864, %v388
    %v1868 = vmul.f32 %v1867, 0.5
    %v1869 = vtanh.pop %v1868
    %v1870 = vadd.f32 %v1869, 1.0
    %v1871 = vmul.f32 %v1870, 0.5
    %1872 = vst [vmem:[%s5] sm:$0x1] %v1867
    %v1873 = vlaneseq
    %v1874 = vshrl.u32 %v1873, 7
    %v1875 = vsub.s32 0, %v1874
    %v1876 = vrot.slane %v1871, %v1875
    %v1877 = vmul.f32 %v1036, %v1876
    %v1878 = vmul.f32 %v1037, %v1876
    %v1879 = vmul.f32 %v1038, %v1876
    %v1880 = vmul.f32 %v1039, %v1876
    %1881 = vmatprep.subr.mxu0 0.0
    %1882 = vmatpush1.msra.mxu0 %v325
    %1883 = vmatprep.subr.mxu0 0.0
    %1884 = vmatpush1.msra.mxu0 %v326
    %1885 = vmatprep.subr.mxu0 0.0
    %1886 = vmatpush1.msra.mxu0 %v327
    %1887 = vmatprep.subr.mxu0 0.0
    %1888 = vmatpush1.msra.mxu0 %v328
    %1889 = vmatprep.subr.mxu0 0.0
    %1890 = vmatpush1.msra.mxu0 %v329
    %1891 = vmatprep.subr.mxu0 0.0
    %1892 = vmatpush1.msra.mxu0 %v330
    %1893 = vmatprep.subr.mxu0 0.0
    %1894 = vmatpush1.msra.mxu0 %v331
    %1895 = vmatprep.subr.mxu0 0.0
    %1896 = vmatpush1.msra.mxu0 %v332
    %1897 = vmatprep.subr.mxu0 0.0
    %1898 = vmatpush1.msra.mxu0 %v333
    %1899 = vmatprep.subr.mxu0 0.0
    %1900 = vmatpush1.msra.mxu0 %v334
    %1901 = vmatprep.subr.mxu0 0.0
    %1902 = vmatpush1.msra.mxu0 %v335
    %1903 = vmatprep.subr.mxu0 0.0
    %1904 = vmatpush1.msra.mxu0 %v336
    %1905 = vmatprep.subr.mxu0 0.0
    %1906 = vmatpush1.msra.mxu0 %v337
    %1907 = vmatprep.subr.mxu0 0.0
    %1908 = vmatpush1.msra.mxu0 %v338
    %1909 = vmatprep.subr.mxu0 0.0
    %1910 = vmatpush1.msra.mxu0 %v339
    %1911 = vmatprep.subr.mxu0 0.0
    %1912 = vmatpush1.msra.mxu0 %v340
    %1913 = vmatprep.subr.mxu0 0.0
    %1914 = vmatpush1.msra.mxu0 0.0
    %1915 = vmatprep.subr.mxu0 0.0
    %1916 = vmatpush1.msra.mxu0 0.0
    %1917 = vmatprep.subr.mxu0 0.0
    %1918 = vmatpush1.msra.mxu0 0.0
    %1919 = vmatprep.subr.mxu0 0.0
    %1920 = vmatpush1.msra.mxu0 0.0
    %1921 = vmatprep.subr.mxu0 0.0
    %1922 = vmatpush1.msra.mxu0 0.0
    %1923 = vmatprep.subr.mxu0 0.0
    %1924 = vmatpush1.msra.mxu0 0.0
    %1925 = vmatprep.subr.mxu0 0.0
    %1926 = vmatpush1.msra.mxu0 0.0
    %1927 = vmatprep.subr.mxu0 0.0
    %1928 = vmatpush1.msra.mxu0 0.0
    %1929 = vmatprep.subr.mxu0 0.0
    %1930 = vmatpush1.msra.mxu0 0.0
    %1931 = vmatprep.subr.mxu0 0.0
    %1932 = vmatpush1.msra.mxu0 0.0
    %1933 = vmatprep.subr.mxu0 0.0
    %1934 = vmatpush1.msra.mxu0 0.0
    %1935 = vmatprep.subr.mxu0 0.0
    %1936 = vmatpush1.msra.mxu0 0.0
    %1937 = vmatprep.subr.mxu0 0.0
    %1938 = vmatpush1.msra.mxu0 0.0
    %1939 = vmatprep.subr.mxu0 0.0
    %1940 = vmatpush1.msra.mxu0 0.0
    %1941 = vmatprep.subr.mxu0 0.0
    %1942 = vmatpush1.msra.mxu0 0.0
    %1943 = vmatprep.subr.mxu0 0.0
    %1944 = vmatpush1.msra.mxu0 0.0
    %1945 = vmatprep.mubr.f32.mxu0 0.0
    %1946 = vmatmul.mubr.f32.gmra.mrb[0].mxu0 %v1877
    %v1947 = vpop.f32.mrb[0].mxu0
    %v1948 = vadd.f32 0.0, %v1947
    %v1949 = vpop.f32.mrb[0].mxu0
    %1950 = vmatprep.mubr.f32.mxu0 0.0
    %1951 = vmatmul.mubr.f32.gmra.mrb[0].mxu0 %v1878
    %v1952 = vpop.f32.mrb[0].mxu0
    %v1953 = vadd.f32 0.0, %v1952
    %v1954 = vpop.f32.mrb[0].mxu0
    %1955 = vmatprep.mubr.f32.mxu0 0.0
    %1956 = vmatmul.mubr.f32.gmra.mrb[0].mxu0 %v1879
    %v1957 = vpop.f32.mrb[0].mxu0
    %v1958 = vadd.f32 0.0, %v1957
    %v1959 = vpop.f32.mrb[0].mxu0
    %1960 = vmatprep.mubr.f32.mxu0 0.0
    %1961 = vmatmul.mubr.f32.gmra.mrb[0].mxu0 %v1880
    %v1962 = vpop.f32.mrb[0].mxu0
    %v1963 = vadd.f32 0.0, %v1962
    %v1964 = vpop.f32.mrb[0].mxu0
    %1965 = vdwg.mxu0
    %v1966 = vld [vmem:[%s4 + $0x38] sm:$0xf]
    %v1967 = vld [vmem:[%s4 + $0x3c] sm:$0xf]
    %v1968 = vld [vmem:[%s4 + $0x40] sm:$0xf]
    %v1969 = vld [vmem:[%s4 + $0x44] sm:$0xf]
    %v1970 = vld [vmem:[%s4 + $0x48] sm:$0xf]
    %v1971 = vld [vmem:[%s4 + $0x4c] sm:$0xf]
    %v1972 = vld [vmem:[%s4 + $0x50] sm:$0xf]
    %v1973 = vld [vmem:[%s4 + $0x54] sm:$0xf]
    %v1974 = vld [vmem:[%s4 + $0x58] sm:$0xf]
    %v1975 = vunpack.c.l.bf16 %v1966
    %v1976 = vunpack.c.l.bf16 %v1967
    %v1977 = vunpack.c.l.bf16 %v1968
    %v1978 = vunpack.c.l.bf16 %v1969
    %v1979 = vunpack.c.l.bf16 %v1970
    %v1980 = vunpack.c.l.bf16 %v1971
    %v1981 = vunpack.c.l.bf16 %v1972
    %v1982 = vunpack.c.l.bf16 %v1973
    %v1983 = vunpack.c.l.bf16 %v1974
    %1984 = vset.pattern.permute.xlu0 0
    %1985 = vperm.xlu0 %1984, %v57
    %v1986 = vpop.permute.xlu0 %1985
    %1988 = vset.pattern.permute.xlu0 0
    %1989 = vperm.xlu0 %1988, %v58
    %v1990 = vpop.permute.xlu0 %1989
    %1992 = vset.pattern.permute.xlu0 0
    %1993 = vperm.xlu0 %1992, %v59
    %v1994 = vpop.permute.xlu0 %1993
    %1996 = vset.pattern.permute.xlu0 0
    %1997 = vperm.xlu0 %1996, %v60
    %v1998 = vpop.permute.xlu0 %1997
    %2000 = vset.pattern.permute.xlu0 0
    %2001 = vperm.xlu0 %2000, %v61
    %v2002 = vpop.permute.xlu0 %2001
    %2004 = vset.pattern.permute.xlu0 0
    %2005 = vperm.xlu0 %2004, %v62
    %v2006 = vpop.permute.xlu0 %2005
    %2008 = vset.pattern.permute.xlu0 0
    %2009 = vperm.xlu0 %2008, %v63
    %v2010 = vpop.permute.xlu0 %2009
    %2012 = vset.pattern.permute.xlu0 0
    %2013 = vperm.xlu0 %2012, %v64
    %v2014 = vpop.permute.xlu0 %2013
    %2016 = vset.pattern.permute.xlu0 0
    %2017 = vperm.xlu0 %2016, %v65
    %v2018 = vpop.permute.xlu0 %2017
    %v2021 = vsel %vm429, %v1975, 0
    %v2024 = vsel %vm429, %v1976, 0
    %v2027 = vsel %vm429, %v1977, 0
    %v2030 = vsel %vm429, %v1978, 0
    %v2033 = vsel %vm429, %v1979, 0
    %v2036 = vsel %vm429, %v1980, 0
    %v2039 = vsel %vm429, %v1981, 0
    %v2042 = vsel %vm429, %v1982, 0
    %v2045 = vsel %vm429, %v1983, 0
    %2047 = vmatprep.subr.mxu0 0.0
    %2048 = vmatpush1.msra.mxu0 %v1948
    %2049 = vmatprep.subr.mxu0 0.0
    %2050 = vmatpush1.msra.mxu0 %v1953
    %2051 = vmatprep.subr.mxu0 0.0
    %2052 = vmatpush1.msra.mxu0 %v1958
    %2053 = vmatprep.subr.mxu0 0.0
    %2054 = vmatpush1.msra.mxu0 %v1963
    %2055 = vmatprep.subr.mxu0 0.0
    %2056 = vmatpush1.msra.mxu0 0.0
    %2057 = vmatprep.subr.mxu0 0.0
    %2058 = vmatpush1.msra.mxu0 0.0
    %2059 = vmatprep.subr.mxu0 0.0
    %2060 = vmatpush1.msra.mxu0 0.0
    %2061 = vmatprep.subr.mxu0 0.0
    %2062 = vmatpush1.msra.mxu0 0.0
    %2063 = vmatprep.subr.mxu0 0.0
    %2064 = vmatpush1.msra.mxu0 0.0
    %2065 = vmatprep.subr.mxu0 0.0
    %2066 = vmatpush1.msra.mxu0 0.0
    %2067 = vmatprep.subr.mxu0 0.0
    %2068 = vmatpush1.msra.mxu0 0.0
    %2069 = vmatprep.subr.mxu0 0.0
    %2070 = vmatpush1.msra.mxu0 0.0
    %2071 = vmatprep.subr.mxu0 0.0
    %2072 = vmatpush1.msra.mxu0 0.0
    %2073 = vmatprep.subr.mxu0 0.0
    %2074 = vmatpush1.msra.mxu0 0.0
    %2075 = vmatprep.subr.mxu0 0.0
    %2076 = vmatpush1.msra.mxu0 0.0
    %2077 = vmatprep.subr.mxu0 0.0
    %2078 = vmatpush1.msra.mxu0 0.0
    %2079 = vmatprep.subr.mxu0 0.0
    %2080 = vmatpush1.msra.mxu0 0.0
    %2081 = vmatprep.subr.mxu0 0.0
    %2082 = vmatpush1.msra.mxu0 0.0
    %2083 = vmatprep.subr.mxu0 0.0
    %2084 = vmatpush1.msra.mxu0 0.0
    %2085 = vmatprep.subr.mxu0 0.0
    %2086 = vmatpush1.msra.mxu0 0.0
    %2087 = vmatprep.subr.mxu0 0.0
    %2088 = vmatpush1.msra.mxu0 0.0
    %2089 = vmatprep.subr.mxu0 0.0
    %2090 = vmatpush1.msra.mxu0 0.0
    %2091 = vmatprep.subr.mxu0 0.0
    %2092 = vmatpush1.msra.mxu0 0.0
    %2093 = vmatprep.subr.mxu0 0.0
    %2094 = vmatpush1.msra.mxu0 0.0
    %2095 = vmatprep.subr.mxu0 0.0
    %2096 = vmatpush1.msra.mxu0 0.0
    %2097 = vmatprep.subr.mxu0 0.0
    %2098 = vmatpush1.msra.mxu0 0.0
    %2099 = vmatprep.subr.mxu0 0.0
    %2100 = vmatpush1.msra.mxu0 0.0
    %2101 = vmatprep.subr.mxu0 0.0
    %2102 = vmatpush1.msra.mxu0 0.0
    %2103 = vmatprep.subr.mxu0 0.0
    %2104 = vmatpush1.msra.mxu0 0.0
    %2105 = vmatprep.subr.mxu0 0.0
    %2106 = vmatpush1.msra.mxu0 0.0
    %2107 = vmatprep.subr.mxu0 0.0
    %2108 = vmatpush1.msra.mxu0 0.0
    %2109 = vmatprep.subr.mxu0 0.0
    %2110 = vmatpush1.msra.mxu0 0.0
    %2111 = vmatprep.mubr.f32.mxu0 0.0
    %2112 = vmatmul.mubr.f32.gmra.mrb[0].mxu0 %v2021
    %v2113 = vpop.f32.mrb[0].mxu0
    %v2114 = vadd.f32 %v1986, %v2113
    %v2115 = vpop.f32.mrb[0].mxu0
    %2116 = vmatprep.mubr.f32.mxu0 0.0
    %2117 = vmatmul.mubr.f32.gmra.mrb[0].mxu0 %v2024
    %v2118 = vpop.f32.mrb[0].mxu0
    %v2119 = vadd.f32 %v1990, %v2118
    %v2120 = vpop.f32.mrb[0].mxu0
    %2121 = vmatprep.mubr.f32.mxu0 0.0
    %2122 = vmatmul.mubr.f32.gmra.mrb[0].mxu0 %v2027
    %v2123 = vpop.f32.mrb[0].mxu0
    %v2124 = vadd.f32 %v1994, %v2123
    %v2125 = vpop.f32.mrb[0].mxu0
    %2126 = vmatprep.mubr.f32.mxu0 0.0
    %2127 = vmatmul.mubr.f32.gmra.mrb[0].mxu0 %v2030
    %v2128 = vpop.f32.mrb[0].mxu0
    %v2129 = vadd.f32 %v1998, %v2128
    %v2130 = vpop.f32.mrb[0].mxu0
    %2131 = vmatprep.mubr.f32.mxu0 0.0
    %2132 = vmatmul.mubr.f32.gmra.mrb[0].mxu0 %v2033
    %v2133 = vpop.f32.mrb[0].mxu0
    %v2134 = vadd.f32 %v2002, %v2133
    %v2135 = vpop.f32.mrb[0].mxu0
    %2136 = vmatprep.mubr.f32.mxu0 0.0
    %2137 = vmatmul.mubr.f32.gmra.mrb[0].mxu0 %v2036
    %v2138 = vpop.f32.mrb[0].mxu0
    %v2139 = vadd.f32 %v2006, %v2138
    %v2140 = vpop.f32.mrb[0].mxu0
    %2141 = vmatprep.mubr.f32.mxu0 0.0
    %2142 = vmatmul.mubr.f32.gmra.mrb[0].mxu0 %v2039
    %v2143 = vpop.f32.mrb[0].mxu0
    %v2144 = vadd.f32 %v2010, %v2143
    %v2145 = vpop.f32.mrb[0].mxu0
    %2146 = vmatprep.mubr.f32.mxu0 0.0
    %2147 = vmatmul.mubr.f32.gmra.mrb[0].mxu0 %v2042
    %v2148 = vpop.f32.mrb[0].mxu0
    %v2149 = vadd.f32 %v2014, %v2148
    %v2150 = vpop.f32.mrb[0].mxu0
    %2151 = vmatprep.mubr.f32.mxu0 0.0
    %2152 = vmatmul.mubr.f32.gmra.mrb[0].mxu0 %v2045
    %v2153 = vpop.f32.mrb[0].mxu0
    %v2154 = vadd.f32 %v2018, %v2153
    %v2155 = vpop.f32.mrb[0].mxu0
    %2156 = vdwg.mxu0
    %v2157 = vadd.f32 %v2114, %v1278
    %v2158 = vadd.f32 %v2119, %v1283
    %v2159 = vadd.f32 %v2124, %v1288
    %v2160 = vmul.f32 %v2157, 0.5
    %v2161 = vmul.f32 %v2158, 0.5
    %v2162 = vmul.f32 %v2159, 0.5
    %v2163 = vtanh.pop %v2160
    %v2164 = vtanh.pop %v2161
    %v2165 = vtanh.pop %v2162
    %v2166 = vadd.f32 %v2163, 1.0
    %v2167 = vadd.f32 %v2164, 1.0
    %v2168 = vadd.f32 %v2165, 1.0
    %v2169 = vmul.f32 %v2166, 0.5
    %v2170 = vmul.f32 %v2167, 0.5
    %v2171 = vmul.f32 %v2168, 0.5
    %v2172 = vadd.f32 %v2129, %v1293
    %v2173 = vadd.f32 %v2134, %v1298
    %v2174 = vadd.f32 %v2139, %v1303
    %v2175 = vmul.f32 %v2172, 0.5
    %v2176 = vmul.f32 %v2173, 0.5
    %v2177 = vmul.f32 %v2174, 0.5
    %v2178 = vtanh.pop %v2175
    %v2179 = vtanh.pop %v2176
    %v2180 = vtanh.pop %v2177
    %v2181 = vadd.f32 %v2178, 1.0
    %v2182 = vadd.f32 %v2179, 1.0
    %v2183 = vadd.f32 %v2180, 1.0
    %v2184 = vmul.f32 %v2181, 0.5
    %v2185 = vmul.f32 %v2182, 0.5
    %v2186 = vmul.f32 %v2183, 0.5
    %v2187 = vmul.f32 %v2169, %v1308
    %v2188 = vmul.f32 %v2170, %v1313
    %v2189 = vmul.f32 %v2171, %v1318
    %v2190 = vadd.f32 %v2144, %v2187
    %v2191 = vadd.f32 %v2149, %v2188
    %v2192 = vadd.f32 %v2154, %v2189
    %v2193 = vtanh.pop %v2190
    %v2194 = vtanh.pop %v2191
    %v2195 = vtanh.pop %v2192
    %v2196 = vsub.f32 1.0, %v2184
    %v2197 = vsub.f32 1.0, %v2185
    %v2198 = vsub.f32 1.0, %v2186
    %v2199 = vmul.f32 %v2196, %v2193
    %v2200 = vmul.f32 %v2197, %v2194
    %v2201 = vmul.f32 %v2198, %v2195
    %v2202 = vmul.f32 %v2184, %v657
    %v2203 = vmul.f32 %v2185, %v662
    %v2204 = vmul.f32 %v2186, %v667
    %v2205 = vadd.f32 %v2199, %v2202
    %v2206 = vadd.f32 %v2200, %v2203
    %v2207 = vadd.f32 %v2201, %v2204
    %v2208 = vld [vmem:[%s4 + $0x88] sm:$0xf]
    %v2209 = vld [vmem:[%s4 + $0x8c] sm:$0xf]
    %v2210 = vunpack.c.l.bf16 %v2208
    %v2211 = vunpack.c.l.bf16 %v2209
    %2212 = vset.pattern.permute.xlu0 6
    %2213 = vperm.xlu0 %2212, %v57
    %v2214 = vpop.permute.xlu0 %2213
    %2216 = vset.pattern.permute.xlu0 6
    %2217 = vperm.xlu0 %2216, %v58
    %v2218 = vpop.permute.xlu0 %2217
    %v2221 = vsel %vm577, %v2210, 0
    %v2224 = vsel %vm577, %v2211, 0
    %2226 = vmatprep.subr.mxu0 0.0
    %2227 = vmatpush1.msra.mxu0 %v2205
    %2228 = vmatprep.subr.mxu0 0.0
    %2229 = vmatpush1.msra.mxu0 %v2206
    %2230 = vmatprep.subr.mxu0 0.0
    %2231 = vmatpush1.msra.mxu0 %v2207
    %2232 = vmatprep.subr.mxu0 0.0
    %2233 = vmatpush1.msra.mxu0 0.0
    %2234 = vmatprep.subr.mxu0 0.0
    %2235 = vmatpush1.msra.mxu0 0.0
    %2236 = vmatprep.subr.mxu0 0.0
    %2237 = vmatpush1.msra.mxu0 0.0
    %2238 = vmatprep.subr.mxu0 0.0
    %2239 = vmatpush1.msra.mxu0 0.0
    %2240 = vmatprep.subr.mxu0 0.0
    %2241 = vmatpush1.msra.mxu0 0.0
    %2242 = vmatprep.subr.mxu0 0.0
    %2243 = vmatpush1.msra.mxu0 0.0
    %2244 = vmatprep.subr.mxu0 0.0
    %2245 = vmatpush1.msra.mxu0 0.0
    %2246 = vmatprep.subr.mxu0 0.0
    %2247 = vmatpush1.msra.mxu0 0.0
    %2248 = vmatprep.subr.mxu0 0.0
    %2249 = vmatpush1.msra.mxu0 0.0
    %2250 = vmatprep.subr.mxu0 0.0
    %2251 = vmatpush1.msra.mxu0 0.0
    %2252 = vmatprep.subr.mxu0 0.0
    %2253 = vmatpush1.msra.mxu0 0.0
    %2254 = vmatprep.subr.mxu0 0.0
    %2255 = vmatpush1.msra.mxu0 0.0
    %2256 = vmatprep.subr.mxu0 0.0
    %2257 = vmatpush1.msra.mxu0 0.0
    %2258 = vmatprep.subr.mxu0 0.0
    %2259 = vmatpush1.msra.mxu0 0.0
    %2260 = vmatprep.subr.mxu0 0.0
    %2261 = vmatpush1.msra.mxu0 0.0
    %2262 = vmatprep.subr.mxu0 0.0
    %2263 = vmatpush1.msra.mxu0 0.0
    %2264 = vmatprep.subr.mxu0 0.0
    %2265 = vmatpush1.msra.mxu0 0.0
    %2266 = vmatprep.subr.mxu0 0.0
    %2267 = vmatpush1.msra.mxu0 0.0
    %2268 = vmatprep.subr.mxu0 0.0
    %2269 = vmatpush1.msra.mxu0 0.0
    %2270 = vmatprep.subr.mxu0 0.0
    %2271 = vmatpush1.msra.mxu0 0.0
    %2272 = vmatprep.subr.mxu0 0.0
    %2273 = vmatpush1.msra.mxu0 0.0
    %2274 = vmatprep.subr.mxu0 0.0
    %2275 = vmatpush1.msra.mxu0 0.0
    %2276 = vmatprep.subr.mxu0 0.0
    %2277 = vmatpush1.msra.mxu0 0.0
    %2278 = vmatprep.subr.mxu0 0.0
    %2279 = vmatpush1.msra.mxu0 0.0
    %2280 = vmatprep.subr.mxu0 0.0
    %2281 = vmatpush1.msra.mxu0 0.0
    %2282 = vmatprep.subr.mxu0 0.0
    %2283 = vmatpush1.msra.mxu0 0.0
    %2284 = vmatprep.subr.mxu0 0.0
    %2285 = vmatpush1.msra.mxu0 0.0
    %2286 = vmatprep.subr.mxu0 0.0
    %2287 = vmatpush1.msra.mxu0 0.0
    %2288 = vmatprep.subr.mxu0 0.0
    %2289 = vmatpush1.msra.mxu0 0.0
    %2290 = vmatprep.mubr.f32.mxu0 0.0
    %2291 = vmatmul.mubr.f32.gmra.mrb[0].mxu0 %v2221
    %v2292 = vpop.f32.mrb[0].mxu0
    %v2293 = vadd.f32 %v2214, %v2292
    %v2294 = vpop.f32.mrb[0].mxu0
    %2295 = vmatprep.mubr.f32.mxu0 0.0
    %2296 = vmatmul.mubr.f32.gmra.mrb[0].mxu0 %v2224
    %v2297 = vpop.f32.mrb[0].mxu0
    %v2298 = vadd.f32 %v2218, %v2297
    %v2299 = vpop.f32.mrb[0].mxu0
    %2300 = vdwg.mxu0
    %v2301 = vsel %vm912, %v409, 0
    %v2303 = vsel %vm912, %v410, 0
    %v2306 = vsel %vm912, %v2293, 0
    %v2309 = vsel %vm912, %v2298, 0
    %2311 = vmatprep.subr.mxu0 0.0
    %2312 = vmatpush1.xpose.msra.mxu0 %v2306
    %2313 = vmatprep.subr.mxu0 0.0
    %2314 = vmatpush1.xpose.msra.mxu0 %v2309
    %2315 = vmatprep.subr.mxu0 0.0
    %2316 = vmatpush1.xpose.msra.mxu0 0.0
    %2317 = vmatprep.subr.mxu0 0.0
    %2318 = vmatpush1.xpose.msra.mxu0 0.0
    %2319 = vmatprep.subr.mxu0 0.0
    %2320 = vmatpush1.xpose.msra.mxu0 0.0
    %2321 = vmatprep.subr.mxu0 0.0
    %2322 = vmatpush1.xpose.msra.mxu0 0.0
    %2323 = vmatprep.subr.mxu0 0.0
    %2324 = vmatpush1.xpose.msra.mxu0 0.0
    %2325 = vmatprep.subr.mxu0 0.0
    %2326 = vmatpush1.xpose.msra.mxu0 0.0
    %2327 = vmatprep.subr.mxu0 0.0
    %2328 = vmatpush1.xpose.msra.mxu0 0.0
    %2329 = vmatprep.subr.mxu0 0.0
    %2330 = vmatpush1.xpose.msra.mxu0 0.0
    %2331 = vmatprep.subr.mxu0 0.0
    %2332 = vmatpush1.xpose.msra.mxu0 0.0
    %2333 = vmatprep.subr.mxu0 0.0
    %2334 = vmatpush1.xpose.msra.mxu0 0.0
    %2335 = vmatprep.subr.mxu0 0.0
    %2336 = vmatpush1.xpose.msra.mxu0 0.0
    %2337 = vmatprep.subr.mxu0 0.0
    %2338 = vmatpush1.xpose.msra.mxu0 0.0
    %2339 = vmatprep.subr.mxu0 0.0
    %2340 = vmatpush1.xpose.msra.mxu0 0.0
    %2341 = vmatprep.subr.mxu0 0.0
    %2342 = vmatpush1.xpose.msra.mxu0 0.0
    %2343 = vmatprep.subr.mxu0 0.0
    %2344 = vmatpush1.xpose.msra.mxu0 0.0
    %2345 = vmatprep.subr.mxu0 0.0
    %2346 = vmatpush1.xpose.msra.mxu0 0.0
    %2347 = vmatprep.subr.mxu0 0.0
    %2348 = vmatpush1.xpose.msra.mxu0 0.0
    %2349 = vmatprep.subr.mxu0 0.0
    %2350 = vmatpush1.xpose.msra.mxu0 0.0
    %2351 = vmatprep.subr.mxu0 0.0
    %2352 = vmatpush1.xpose.msra.mxu0 0.0
    %2353 = vmatprep.subr.mxu0 0.0
    %2354 = vmatpush1.xpose.msra.mxu0 0.0
    %2355 = vmatprep.subr.mxu0 0.0
    %2356 = vmatpush1.xpose.msra.mxu0 0.0
    %2357 = vmatprep.subr.mxu0 0.0
    %2358 = vmatpush1.xpose.msra.mxu0 0.0
    %2359 = vmatprep.subr.mxu0 0.0
    %2360 = vmatpush1.xpose.msra.mxu0 0.0
    %2361 = vmatprep.subr.mxu0 0.0
    %2362 = vmatpush1.xpose.msra.mxu0 0.0
    %2363 = vmatprep.subr.mxu0 0.0
    %2364 = vmatpush1.xpose.msra.mxu0 0.0
    %2365 = vmatprep.subr.mxu0 0.0
    %2366 = vmatpush1.xpose.msra.mxu0 0.0
    %2367 = vmatprep.subr.mxu0 0.0
    %2368 = vmatpush1.xpose.msra.mxu0 0.0
    %2369 = vmatprep.subr.mxu0 0.0
    %2370 = vmatpush1.xpose.msra.mxu0 0.0
    %2371 = vmatprep.subr.mxu0 0.0
    %2372 = vmatpush1.xpose.msra.mxu0 0.0
    %2373 = vmatprep.subr.mxu0 0.0
    %2374 = vmatpush1.xpose.msra.mxu0 0.0
    %2375 = vmatprep.mubr.f32.mxu0 0.0
    %2376 = vmatmul.mubr.f32.gmra.mrb[0].mxu0 %v2301
    %v2377 = vpop.f32.mrb[0].mxu0
    %v2378 = vadd.f32 0.0, %v2377
    %v2379 = vpop.f32.mrb[0].mxu0
    %2380 = vmatprep.mubr.f32.mxu0 0.0
    %2381 = vmatmul.mubr.f32.gmra.mrb[0].mxu0 %v2303
    %v2382 = vpop.f32.mrb[0].mxu0
    %v2383 = vadd.f32 0.0, %v2382
    %v2384 = vpop.f32.mrb[0].mxu0
    %2385 = vdwg.mxu0
    %v2386 = vmul.f32 %v2378, %v399
    %v2387 = vmul.f32 %v2383, %v400
    %vm2388 = vcmask 80896
    %2389 = vst.msk [vmem:[#allocation7] sm:$0xff] %vm2388, %v2386
    %2390 = vst.msk [vmem:[#allocation7 + $0x8] sm:$0xff] %vm2388, %v2387
    // Predicated region
    $region30: #{gpnn_forward.1} parent=1 // pred_check
      _
    $region31: #{gpnn_forward.1} parent=1 // pred_check_branch
      %2392 = sbr.rel (0) target = $region33
    $region32: #{gpnn_forward.1} parent=1 // pred_region
      _
    $region33: #{gpnn_forward.1} parent=1 // pred_fallthru
      _
    // Predicated region
    $region34: #{gpnn_forward.1} parent=1 // pred_check
      _
    $region35: #{gpnn_forward.1} parent=1 // pred_check_branch
      %2394 = sbr.rel (0) target = $region37
    $region36: #{gpnn_forward.1} parent=1 // pred_region
      %s2396 = ssub.s32 256, 256
      %2397 = vsyncadd [#allocation3], %s2396
      %s2398 = sshll.u32 [#allocation7], 4
      %s2399 = int_to_ptr.vmem [resolvable:$true] %s2398
      %2404 = dma.vmem_to_hbm [thread:$0]  %s2399, 256, %s6, [#allocation3], 128, 128, 8
    $region37: #{gpnn_forward.1} parent=1 // pred_fallthru
      _
    // Predicated region
    $region38: #{gpnn_forward.1} parent=1 // pred_check
      _
    $region39: #{gpnn_forward.1} parent=1 // pred_check_branch
      %2406 = sbr.rel (0) target = $region41
    $region40: #{gpnn_forward.1} parent=1 // pred_region
      _
    $region41: #{gpnn_forward.1} parent=1 // pred_fallthru
      _
    // Predicated region
    $region42: #{gpnn_forward.1} parent=1 // pred_check
      _
    $region43: #{gpnn_forward.1} parent=1 // pred_check_branch
      %2408 = sbr.rel (0) target = $region45
    $region44: #{gpnn_forward.1} parent=1 // pred_region
      %2409 = dma.done [#allocation3], 256
    $region45: #{gpnn_forward.1} parent=1 // pred_fallthru
      _
    %2410 = vsyncpa [#allocation3], 1
    %2411 = vsyncpa [#allocation4], 1
    %2412 = vsyncpa [#allocation6], 1

</llo_original>
